<compile_context>
chip_gen: v7x
topology: tpu7x:2x2x1
jax: 0.10.0
libtpu: 0.0.40
codegen_flags: <defaults>
</compile_context>

<pallas_src>
import math

import jax
import jax.numpy as jnp
from jax import lax
from jax.experimental import pallas as pl
from jax.experimental.pallas import tpu as pltpu


_HIGHEST = lax.Precision.HIGHEST
# Contract dim 1 of both operands: x[b, k] . w[n, k] -> y[b, n]; the weight is
# consumed in its native [out, in] layout (no XLU transpose).
_DN = (((1,), (1,)), ((), ()))


# ---------------------------------------------------------------------------
# Kernels
# ---------------------------------------------------------------------------

def _noisy_linear_train_kernel(x_ref, eps_in_ref, wmu_ref, wsig_ref,
                               bmu_ref, bsig_ref, eps_out_ref,
                               o_ref, acc_mu_ref, acc_sig_ref):
    """Grid = (out_tiles, in_tiles); in_tiles (K) is the reduction axis.

    Two-matmul form:
        acc_mu  += x @ Wmu.T
        acc_sig += (x * eps_in) @ Wsig.T
        o = acc_mu + eps_out * acc_sig + (bmu + bsig * eps_out)
    """
    k = pl.program_id(1)

    x = x_ref[...]                                # [b_pad, tk]
    x_eps = x * eps_in_ref[...]                   # cheap VPU: b_pad*tk, not tn*tk

    p_mu = lax.dot_general(x, wmu_ref[...], dimension_numbers=_DN,
                           precision=_HIGHEST,
                           preferred_element_type=jnp.float32)
    p_sig = lax.dot_general(x_eps, wsig_ref[...], dimension_numbers=_DN,
                            precision=_HIGHEST,
                            preferred_element_type=jnp.float32)

    @pl.when(k == 0)
    def _():                                      # direct write, no zero-fill
        acc_mu_ref[...] = p_mu
        acc_sig_ref[...] = p_sig

    @pl.when(k > 0)
    def _():
        acc_mu_ref[...] += p_mu
        acc_sig_ref[...] += p_sig

    @pl.when(k == pl.num_programs(1) - 1)
    def _():
        eps_out = eps_out_ref[...]                          # [1, tn]
        bias = bmu_ref[...] + bsig_ref[...] * eps_out       # [1, tn]
        o_ref[...] = (acc_mu_ref[...] + eps_out * acc_sig_ref[...]
                      + bias).astype(o_ref.dtype)


def _linear_eval_kernel(x_ref, wmu_ref, bmu_ref, o_ref, acc_ref):
    """Eval path: y = x @ weight_mu.T + bias_mu (sigma / epsilon never loaded)."""
    k = pl.program_id(1)

    p = lax.dot_general(x_ref[...], wmu_ref[...], dimension_numbers=_DN,
                        precision=_HIGHEST,
                        preferred_element_type=jnp.float32)

    @pl.when(k == 0)
    def _():
        acc_ref[...] = p

    @pl.when(k > 0)
    def _():
        acc_ref[...] += p

    @pl.when(k == pl.num_programs(1) - 1)
    def _():
        o_ref[...] = (acc_ref[...] + bmu_ref[...]).astype(o_ref.dtype)


# ---------------------------------------------------------------------------
# Wrapper
# ---------------------------------------------------------------------------

def _round_up(x, m):
    return ((x + m - 1) // m) * m


def _pick_tile(dim_pad, cap):
    """Largest multiple of 128 that divides `dim_pad` and is <= max(cap, 128)."""
    cap = max(cap, 128)
    best = 128
    for d in range(128, dim_pad + 1, 128):
        if dim_pad % d == 0 and d <= cap:
            best = d
    return best


def _pad_to(a, *shape):
    pads = tuple((0, t - s) for s, t in zip(a.shape, shape))
    if all(p == (0, 0) for p in pads):
        return a                                  # avoid HBM copies when aligned
    return jnp.pad(a, pads)


def noisy_linear(x, weight_mu, weight_sigma, epsilon_in, epsilon_out,
                 bias_mu, bias_sigma, *, training=True, tn=512, tk=2048,
                 param_dtype=None, vmem_limit_bytes=48 * 1024 * 1024):
    """Pallas NoisyLinear forward.

    epsilon_in / epsilon_out are the factored noise vectors produced by
    reset_noise(); the module buffers are weight_epsilon = outer(eps_out,
    eps_in) and bias_epsilon = eps_out, so this matches the PyTorch forward
    while streaming only 2 (not 3) weight-sized arrays from HBM.  The
    noise contribution is folded in via a second matmul, so results differ
    from the elementwise reconstruction only by float accumulation order.
    """
    out_dtype = x.dtype
    B, in_f = x.shape
    out_f, in_f2 = weight_mu.shape
    assert in_f == in_f2, (in_f, in_f2)

    # Optional reduced-precision weight streaming (bandwidth-bound kernel):
    # cast streamed operands; accumulation / bias epilogue stay float32.
    if param_dtype is not None:
        x = x.astype(param_dtype)
        weight_mu = weight_mu.astype(param_dtype)
        weight_sigma = weight_sigma.astype(param_dtype)
        epsilon_in = epsilon_in.astype(param_dtype)

    itemsize = jnp.dtype(x.dtype).itemsize
    sublane = max(8, 32 // itemsize)              # f32 -> 8, bf16 -> 16
    b_pad = _round_up(B, sublane)

    # Pad only to layout quanta (NOT tile multiples); tiles divide padded dims.
    in_pad = _round_up(in_f, 128)
    out_pad = _round_up(out_f, 128)
    tk = _pick_tile(in_pad, tk)
    # Keep >= 2 output tiles when possible so ("parallel", ...) can shard the
    # output axis across both v7x TensorCores (no effect on v5e/v6e).
    tn_cap = tn if out_pad < 256 else min(tn, out_pad // 2)
    tn = _pick_tile(out_pad, tn_cap)
    n_tiles = out_pad // tn
    k_tiles = in_pad // tk

    x_p = _pad_to(x, b_pad, in_pad)
    wmu_p = _pad_to(weight_mu, out_pad, in_pad)
    bmu_p = _pad_to(bias_mu.reshape(1, out_f), 1, out_pad)

    w_itemsize = jnp.dtype(weight_mu.dtype).itemsize
    flops = (4 if training else 2) * b_pad * in_pad * out_pad
    cparams = pltpu.CompilerParams(
        dimension_semantics=("parallel", "arbitrary"),
        vmem_limit_bytes=vmem_limit_bytes,
    )

    # TODO(synk): the x BlockSpec index_map (0, k) re-streams x once per output
    # tile; add a parallel batch grid axis if B ever reaches the thousands.
    if training:
        wsig_p = _pad_to(weight_sigma, out_pad, in_pad)
        bsig_p = _pad_to(bias_sigma.reshape(1, out_f), 1, out_pad)
        eps_in_p = _pad_to(epsilon_in.reshape(1, in_f), 1, in_pad)
        eps_out_p = _pad_to(epsilon_out.reshape(1, out_f), 1, out_pad)

        bytes_accessed = (
            2 * out_pad * in_pad * w_itemsize              # weight_mu, weight_sigma
            + n_tiles * b_pad * in_pad * itemsize          # x (re-streamed per j)
            + b_pad * out_pad * jnp.dtype(out_dtype).itemsize
            + 4 * (in_pad + 3 * out_pad))                  # noise vectors + biases

        grid_spec = pltpu.PrefetchScalarGridSpec(
            num_scalar_prefetch=0,
            grid=(n_tiles, k_tiles),
            in_specs=[
                pl.BlockSpec((b_pad, tk), lambda j, k: (0, k)),   # x
                pl.BlockSpec((1, tk), lambda j, k: (0, k)),       # eps_in
                pl.BlockSpec((tn, tk), lambda j, k: (j, k)),      # weight_mu
                pl.BlockSpec((tn, tk), lambda j, k: (j, k)),      # weight_sigma
                pl.BlockSpec((1, tn), lambda j, k: (0, j)),       # bias_mu
                pl.BlockSpec((1, tn), lambda j, k: (0, j)),       # bias_sigma
                pl.BlockSpec((1, tn), lambda j, k: (0, j)),       # eps_out
            ],
            out_specs=pl.BlockSpec((b_pad, tn), lambda j, k: (0, j)),
            scratch_shapes=[pltpu.VMEM((b_pad, tn), jnp.float32),
                            pltpu.VMEM((b_pad, tn), jnp.float32)],
        )
        out = pl.pallas_call(
            _noisy_linear_train_kernel,
            out_shape=jax.ShapeDtypeStruct((b_pad, out_pad), out_dtype),
            grid_spec=grid_spec,
            compiler_params=cparams,
            cost_estimate=pl.CostEstimate(
                flops=flops, transcendentals=0, bytes_accessed=bytes_accessed),
        )(x_p, eps_in_p, wmu_p, wsig_p, bmu_p, bsig_p, eps_out_p)
    else:
        bytes_accessed = (
            out_pad * in_pad * w_itemsize
            + n_tiles * b_pad * in_pad * itemsize
            + b_pad * out_pad * jnp.dtype(out_dtype).itemsize
            + 4 * out_pad)

        grid_spec = pltpu.PrefetchScalarGridSpec(
            num_scalar_prefetch=0,
            grid=(n_tiles, k_tiles),
            in_specs=[
                pl.BlockSpec((b_pad, tk), lambda j, k: (0, k)),   # x
                pl.BlockSpec((tn, tk), lambda j, k: (j, k)),      # weight_mu
                pl.BlockSpec((1, tn), lambda j, k: (0, j)),       # bias_mu
            ],
            out_specs=pl.BlockSpec((b_pad, tn), lambda j, k: (0, j)),
            scratch_shapes=[pltpu.VMEM((b_pad, tn), jnp.float32)],
        )
        out = pl.pallas_call(
            _linear_eval_kernel,
            out_shape=jax.ShapeDtypeStruct((b_pad, out_pad), out_dtype),
            grid_spec=grid_spec,
            compiler_params=cparams,
            cost_estimate=pl.CostEstimate(
                flops=flops, transcendentals=0, bytes_accessed=bytes_accessed),
        )(x_p, wmu_p, bmu_p)

    return out[:B, :out_f]


# ---------------------------------------------------------------------------
# Parameter / noise initialization (reset_parameters + reset_noise)
# ---------------------------------------------------------------------------

def _scale_noise(key, size):
    # torch: x = randn(size); return x.sign() * x.abs().sqrt()
    x = jax.random.normal(key, (size,), dtype=jnp.float32)
    return jnp.sign(x) * jnp.sqrt(jnp.abs(x))


def init_noisy_linear_params(key, in_features, out_features, std_init=0.5):
    k_wmu, k_bmu, k_eps_in, k_eps_out = jax.random.split(key, 4)
    mu_range = 1.0 / math.sqrt(in_features)

    weight_mu = jax.random.uniform(
        k_wmu, (out_features, in_features), jnp.float32, -mu_range, mu_range)
    weight_sigma = jnp.full((out_features, in_features),
                            std_init / math.sqrt(in_features), jnp.float32)
    bias_mu = jax.random.uniform(
        k_bmu, (out_features,), jnp.float32, -mu_range, mu_range)
    bias_sigma = jnp.full((out_features,),
                          std_init / math.sqrt(out_features), jnp.float32)

    epsilon_in = _scale_noise(k_eps_in, in_features)
    epsilon_out = _scale_noise(k_eps_out, out_features)
    # Materialized module buffers (kept only for the reference check):
    weight_epsilon = jnp.outer(epsilon_out, epsilon_in)
    bias_epsilon = epsilon_out

    return dict(weight_mu=weight_mu, weight_sigma=weight_sigma,
                epsilon_in=epsilon_in, epsilon_out=epsilon_out,
                weight_epsilon=weight_epsilon, bias_epsilon=bias_epsilon,
                bias_mu=bias_mu, bias_sigma=bias_sigma)


def _reference(x, params, training):
    """Pure-JAX reference using the materialized module buffers (PyTorch spec)."""
    w = params["weight_mu"]
    b = params["bias_mu"]
    if training:
        w = w + params["weight_sigma"] * params["weight_epsilon"]
        b = b + params["bias_sigma"] * params["bias_epsilon"]
    return jnp.dot(x, w.T, precision=_HIGHEST) + b


if __name__ == "__main__":
    key = jax.random.PRNGKey(0)

    def check(batch, in_features, out_features, **tile_kw):
        kp, kx = jax.random.split(
            jax.random.fold_in(key, 131 * in_features + out_features))
        params = init_noisy_linear_params(kp, in_features, out_features,
                                          std_init=0.5)
        x = jax.random.normal(kx, (batch, in_features), dtype=jnp.float32)
        for training in (True, False):
            y = jax.block_until_ready(noisy_linear(
                x,
                params["weight_mu"], params["weight_sigma"],
                params["epsilon_in"], params["epsilon_out"],
                params["bias_mu"], params["bias_sigma"],
                training=training, **tile_kw))
            y_ref = _reference(x, params, training)
            assert y.shape == (batch, out_features)
            err = float(jnp.max(jnp.abs(y - y_ref)))
            assert jnp.allclose(y, y_ref, atol=1e-4, rtol=1e-4), (training, err)

    # Small single-tile case (module-sized shapes), default tiles.
    check(8, 32, 64)
    # Multi-tile case: exercises the K-accumulation loop, the >1-tile parallel
    # output axis, output trimming (320 -> 384 pad) and batch padding (5 -> 8).
    check(5, 384, 320, tn=128, tk=128)

    print("KERNEL_OK")
</pallas_src>

<mosaic_0001>
module attributes {stable_mosaic.version = 11 : i64} {
  func.func @_noisy_linear_train_kernel(%arg0: i32, %arg1: i32, %arg2: memref<8x128xf32, #tpu.memory_space<vmem>>, %arg3: memref<1x128xf32, #tpu.memory_space<vmem>>, %arg4: memref<128x128xf32, #tpu.memory_space<vmem>>, %arg5: memref<128x128xf32, #tpu.memory_space<vmem>>, %arg6: memref<1x128xf32, #tpu.memory_space<vmem>>, %arg7: memref<1x128xf32, #tpu.memory_space<vmem>>, %arg8: memref<1x128xf32, #tpu.memory_space<vmem>>, %arg9: memref<8x128xf32, #tpu.memory_space<vmem>>, %arg10: memref<8x128xf32, #tpu.memory_space<vmem>>, %arg11: memref<8x128xf32, #tpu.memory_space<vmem>>) attributes {dimension_semantics = [#tpu.dimension_semantics<parallel>, #tpu.dimension_semantics<arbitrary>], iteration_bounds = array<i64: 1, 1>, scalar_prefetch = 0 : i64, scratch_operands = 2 : i64, tpu.core_type = #tpu.core_type<tc>, window_params = [{transform_indices = @transform_0, window_bounds = array<i64: 8, 128>}, {transform_indices = @transform_1, window_bounds = array<i64: 1, 128>}, {transform_indices = @transform_2, window_bounds = array<i64: 128, 128>}, {transform_indices = @transform_3, window_bounds = array<i64: 128, 128>}, {transform_indices = @transform_4, window_bounds = array<i64: 1, 128>}, {transform_indices = @transform_5, window_bounds = array<i64: 1, 128>}, {transform_indices = @transform_6, window_bounds = array<i64: 1, 128>}, {transform_indices = @transform_7, window_bounds = array<i64: 8, 128>}]} {
    %c0 = arith.constant 0 : index
    %c0_0 = arith.constant 0 : index
    %0 = vector.load %arg2[%c0, %c0_0] : memref<8x128xf32, #tpu.memory_space<vmem>>, vector<8x128xf32>
    %c0_1 = arith.constant 0 : index
    %c0_2 = arith.constant 0 : index
    %1 = vector.load %arg3[%c0_1, %c0_2] : memref<1x128xf32, #tpu.memory_space<vmem>>, vector<1x128xf32>
    %2 = vector.broadcast %1 : vector<1x128xf32> to vector<8x128xf32>
    %3 = arith.mulf %0, %2 : vector<8x128xf32>
    %c0_3 = arith.constant 0 : index
    %c0_4 = arith.constant 0 : index
    %4 = vector.load %arg4[%c0_3, %c0_4] : memref<128x128xf32, #tpu.memory_space<vmem>>, vector<128x128xf32>
    %cst = arith.constant dense<0.000000e+00> : vector<8x128xf32>
    %5 = tpu.matmul %0, %4, %cst {dimension_numbers = #tpu.dot_dimension_numbers<[1], [1], [0], [0], [0, 0, 1, 0], [], []>, precision = #tpu.contract_precision<fp32>} : vector<8x128xf32>, vector<128x128xf32>, vector<8x128xf32> -> vector<8x128xf32>
    %c0_5 = arith.constant 0 : index
    %c0_6 = arith.constant 0 : index
    %6 = vector.load %arg5[%c0_5, %c0_6] : memref<128x128xf32, #tpu.memory_space<vmem>>, vector<128x128xf32>
    %cst_7 = arith.constant dense<0.000000e+00> : vector<8x128xf32>
    %7 = tpu.matmul %3, %6, %cst_7 {dimension_numbers = #tpu.dot_dimension_numbers<[1], [1], [0], [0], [0, 0, 1, 0], [], []>, precision = #tpu.contract_precision<fp32>} : vector<8x128xf32>, vector<128x128xf32>, vector<8x128xf32> -> vector<8x128xf32>
    %c0_i32 = arith.constant 0 : i32
    %8 = arith.cmpi eq, %arg1, %c0_i32 : i32
    %9 = arith.extui %8 : i1 to i32
    %c0_i32_8 = arith.constant 0 : i32
    %10 = arith.cmpi ne, %9, %c0_i32_8 : i32
    scf.if %10 {
      %c0_13 = arith.constant 0 : index
      %c0_14 = arith.constant 0 : index
      %17 = vector.load %arg10[%c0_13, %c0_14] : memref<8x128xf32, #tpu.memory_space<vmem>>, vector<8x128xf32>
      tpu.vector_store %arg10[%c0_13, %c0_14], %5 {strides = array<i32>} : memref<8x128xf32, #tpu.memory_space<vmem>>, vector<8x128xf32>,
      %c0_15 = arith.constant 0 : index
      %c0_16 = arith.constant 0 : index
      %18 = vector.load %arg11[%c0_15, %c0_16] : memref<8x128xf32, #tpu.memory_space<vmem>>, vector<8x128xf32>
      tpu.vector_store %arg11[%c0_15, %c0_16], %7 {strides = array<i32>} : memref<8x128xf32, #tpu.memory_space<vmem>>, vector<8x128xf32>,
    } else {
    }
    %c0_i32_9 = arith.constant 0 : i32
    %11 = arith.cmpi sgt, %arg1, %c0_i32_9 : i32
    %12 = arith.extui %11 : i1 to i32
    %c0_i32_10 = arith.constant 0 : i32
    %13 = arith.cmpi ne, %12, %c0_i32_10 : i32
    scf.if %13 {
      %c0_13 = arith.constant 0 : index
      %c0_14 = arith.constant 0 : index
      %17 = vector.load %arg10[%c0_13, %c0_14] : memref<8x128xf32, #tpu.memory_space<vmem>>, vector<8x128xf32>
      %18 = arith.addf %17, %5 : vector<8x128xf32>
      %c0_15 = arith.constant 0 : index
      %c0_16 = arith.constant 0 : index
      %19 = vector.load %arg10[%c0_15, %c0_16] : memref<8x128xf32, #tpu.memory_space<vmem>>, vector<8x128xf32>
      tpu.vector_store %arg10[%c0_15, %c0_16], %18 {strides = array<i32>} : memref<8x128xf32, #tpu.memory_space<vmem>>, vector<8x128xf32>,
      %c0_17 = arith.constant 0 : index
      %c0_18 = arith.constant 0 : index
      %20 = vector.load %arg11[%c0_17, %c0_18] : memref<8x128xf32, #tpu.memory_space<vmem>>, vector<8x128xf32>
      %21 = arith.addf %20, %7 : vector<8x128xf32>
      %c0_19 = arith.constant 0 : index
      %c0_20 = arith.constant 0 : index
      %22 = vector.load %arg11[%c0_19, %c0_20] : memref<8x128xf32, #tpu.memory_space<vmem>>, vector<8x128xf32>
      tpu.vector_store %arg11[%c0_19, %c0_20], %21 {strides = array<i32>} : memref<8x128xf32, #tpu.memory_space<vmem>>, vector<8x128xf32>,
    } else {
    }
    %c0_i32_11 = arith.constant 0 : i32
    %14 = arith.cmpi eq, %arg1, %c0_i32_11 : i32
    %15 = arith.extui %14 : i1 to i32
    %c0_i32_12 = arith.constant 0 : i32
    %16 = arith.cmpi ne, %15, %c0_i32_12 : i32
    scf.if %16 {
      %c0_13 = arith.constant 0 : index
      %c0_14 = arith.constant 0 : index
      %17 = vector.load %arg8[%c0_13, %c0_14] : memref<1x128xf32, #tpu.memory_space<vmem>>, vector<1x128xf32>
      %c0_15 = arith.constant 0 : index
      %c0_16 = arith.constant 0 : index
      %18 = vector.load %arg6[%c0_15, %c0_16] : memref<1x128xf32, #tpu.memory_space<vmem>>, vector<1x128xf32>
      %c0_17 = arith.constant 0 : index
      %c0_18 = arith.constant 0 : index
      %19 = vector.load %arg7[%c0_17, %c0_18] : memref<1x128xf32, #tpu.memory_space<vmem>>, vector<1x128xf32>
      %20 = arith.mulf %19, %17 : vector<1x128xf32>
      %21 = arith.addf %18, %20 : vector<1x128xf32>
      %c0_19 = arith.constant 0 : index
      %c0_20 = arith.constant 0 : index
      %22 = vector.load %arg10[%c0_19, %c0_20] : memref<8x128xf32, #tpu.memory_space<vmem>>, vector<8x128xf32>
      %c0_21 = arith.constant 0 : index
      %c0_22 = arith.constant 0 : index
      %23 = vector.load %arg11[%c0_21, %c0_22] : memref<8x128xf32, #tpu.memory_space<vmem>>, vector<8x128xf32>
      %24 = vector.broadcast %17 : vector<1x128xf32> to vector<8x128xf32>
      %25 = arith.mulf %24, %23 : vector<8x128xf32>
      %26 = arith.addf %22, %25 : vector<8x128xf32>
      %27 = vector.broadcast %21 : vector<1x128xf32> to vector<8x128xf32>
      %28 = arith.addf %26, %27 : vector<8x128xf32>
      %c0_23 = arith.constant 0 : index
      %c0_24 = arith.constant 0 : index
      %29 = vector.load %arg9[%c0_23, %c0_24] : memref<8x128xf32, #tpu.memory_space<vmem>>, vector<8x128xf32>
      tpu.vector_store %arg9[%c0_23, %c0_24], %28 {strides = array<i32>} : memref<8x128xf32, #tpu.memory_space<vmem>>, vector<8x128xf32>,
    } else {
    }
    return
  }
  func.func @transform_0(%arg0: i32, %arg1: i32) -> (i32, i32) {
    %c0_i32 = arith.constant 0 : i32
    %c0_i32_0 = arith.constant 0 : i32
    return %c0_i32, %arg1 : i32, i32
  }
  func.func @transform_1(%arg0: i32, %arg1: i32) -> (i32, i32) {
    %c0_i32 = arith.constant 0 : i32
    %c0_i32_0 = arith.constant 0 : i32
    return %c0_i32, %arg1 : i32, i32
  }
  func.func @transform_2(%arg0: i32, %arg1: i32) -> (i32, i32) {
    %c0_i32 = arith.constant 0 : i32
    return %arg0, %arg1 : i32, i32
  }
  func.func @transform_3(%arg0: i32, %arg1: i32) -> (i32, i32) {
    %c0_i32 = arith.constant 0 : i32
    return %arg0, %arg1 : i32, i32
  }
  func.func @transform_4(%arg0: i32, %arg1: i32) -> (i32, i32) {
    %c0_i32 = arith.constant 0 : i32
    %c0_i32_0 = arith.constant 0 : i32
    return %c0_i32, %arg0 : i32, i32
  }
  func.func @transform_5(%arg0: i32, %arg1: i32) -> (i32, i32) {
    %c0_i32 = arith.constant 0 : i32
    %c0_i32_0 = arith.constant 0 : i32
    return %c0_i32, %arg0 : i32, i32
  }
  func.func @transform_6(%arg0: i32, %arg1: i32) -> (i32, i32) {
    %c0_i32 = arith.constant 0 : i32
    %c0_i32_0 = arith.constant 0 : i32
    return %c0_i32, %arg0 : i32, i32
  }
  func.func @transform_7(%arg0: i32, %arg1: i32) -> (i32, i32) {
    %c0_i32 = arith.constant 0 : i32
    %c0_i32_0 = arith.constant 0 : i32
    return %c0_i32, %arg0 : i32, i32
  }
}

</mosaic_0001>

<llo_original>
// kernel: tpu_custom_call.1
$region0: #{tpu_custom_call.1}
  #allocation0 [shape = 'u32[]', space=smem, size = 0x4, offset = 0x4, fixed_abs, tag = 'smem constant byte address 0x4 - core index']
  #allocation1 [shape = 'u32[144,128]{1,0:T(1,128)}', space=vmem, size = 0x12000, scoped, tag = 'internal scratch']
  #allocation2 [shape = 'f32[8,128]{1,0:T(8,128)}', space=vmem, size = 0x1000, scoped, tag = 'scratch operand']
  #allocation3 [shape = 'f32[8,128]{1,0:T(8,128)}', space=vmem, size = 0x1000, scoped, tag = 'scratch operand']
  %s0 = inlined_call_operand.hbm [shape: f32[8,128], index: 0, kind: input, shape index: {}]
  %s1 = inlined_call_operand.vmem [shape: f32[1,128], index: 1, kind: input, shape index: {}]
  %s2 = inlined_call_operand.hbm [shape: f32[128,128], index: 2, kind: input, shape index: {}]
  %s3 = inlined_call_operand.hbm [shape: f32[128,128], index: 3, kind: input, shape index: {}]
  %s4 = inlined_call_operand.vmem [shape: f32[1,128], index: 4, kind: input, shape index: {}]
  %s5 = inlined_call_operand.vmem [shape: f32[1,128], index: 5, kind: input, shape index: {}]
  %s6 = inlined_call_operand.vmem [shape: f32[1,128], index: 6, kind: input, shape index: {}]
  %s7 = inlined_call_operand.hbm [shape: f32[8,128], index: 7, kind: output, shape index: {}]
  %s8 = sld [smem:[#allocation0]]
  $region62: #{tpu_custom_call.1} parent=0
    _
  %s10 = ssub.s32 1, %s8
  %s11 = scalar_select 0, %s10, %s8
  $region1: #{tpu_custom_call.1} parent=0
    #allocation4 [shape = 'u8[4096]{0}', space=vmem, size = 0x1000, scoped, tag = 'input window, operand 0, single buffered']
    #allocation5 [shape = 's32[1]{0}', space=sflag, size = 0x4, scoped, tag = 'scoped memory for tpu_custom_call.1']
    #allocation6 [shape = 's32[1]{0}', space=sflag, size = 0x4, scoped, tag = 'scoped memory for tpu_custom_call.1']
    #allocation7 [shape = 'u8[65536]{0}', space=vmem, size = 0x10000, scoped, tag = 'input window, operand 2, single buffered']
    #allocation8 [shape = 's32[1]{0}', space=sflag, size = 0x4, scoped, tag = 'scoped memory for tpu_custom_call.1']
    #allocation9 [shape = 'u8[65536]{0}', space=vmem, size = 0x10000, scoped, tag = 'input window, operand 3, single buffered']
    #allocation10 [shape = 'u8[4096]{0}', space=vmem, size = 0x1000, scoped, tag = 'output window, operand 0, single buffered']
    %12 = vsyncpa [#allocation5], 0
    %13 = vsyncpa [#allocation8], 0
    %14 = vsyncpa [#allocation6], 0
    // Predicated region
    $region2: #{tpu_custom_call.1} parent=1 // pred_check
      _
    $region3: #{tpu_custom_call.1} parent=1 // pred_check_branch
      %16 = sbr.rel (0) target = $region5
    $region4: #{tpu_custom_call.1} parent=1 // pred_region
      %s18 = ssub.s32 128, 128
      %19 = vsyncadd [#allocation5], %s18
      %s21 = sshll.u32 [#allocation4], 4
      %s22 = int_to_ptr.vmem [resolvable:$true] %s21
      %24 = dma.hbm_to_vmem [thread:$0]  %s0, 128, %s22, [#allocation5]
    $region5: #{tpu_custom_call.1} parent=1 // pred_fallthru
      _
    // Predicated region
    $region6: #{tpu_custom_call.1} parent=1 // pred_check
      _
    $region7: #{tpu_custom_call.1} parent=1 // pred_check_branch
      %26 = sbr.rel (0) target = $region9
    $region8: #{tpu_custom_call.1} parent=1 // pred_region
      _
    $region9: #{tpu_custom_call.1} parent=1 // pred_fallthru
      _
    // Predicated region
    $region10: #{tpu_custom_call.1} parent=1 // pred_check
      _
    $region11: #{tpu_custom_call.1} parent=1 // pred_check_branch
      %28 = sbr.rel (0) target = $region13
    $region12: #{tpu_custom_call.1} parent=1 // pred_region
      %s30 = ssub.s32 2048, 2048
      %31 = vsyncadd [#allocation8], %s30
      %s32 = sshll.u32 [#allocation7], 4
      %s33 = int_to_ptr.vmem [resolvable:$true] %s32
      %38 = dma.hbm_to_vmem [thread:$0]  %s2, 2048, %s33, [#allocation8], 128, 128, 8
    $region13: #{tpu_custom_call.1} parent=1 // pred_fallthru
      _
    // Predicated region
    $region14: #{tpu_custom_call.1} parent=1 // pred_check
      _
    $region15: #{tpu_custom_call.1} parent=1 // pred_check_branch
      %40 = sbr.rel (0) target = $region17
    $region16: #{tpu_custom_call.1} parent=1 // pred_region
      %s42 = ssub.s32 2048, 2048
      %43 = vsyncadd [#allocation8], %s42
      %s44 = sshll.u32 [#allocation9], 4
      %s45 = int_to_ptr.vmem [resolvable:$true] %s44
      %50 = dma.hbm_to_vmem [thread:$0]  %s3, 2048, %s45, [#allocation8], 128, 128, 8
    $region17: #{tpu_custom_call.1} parent=1 // pred_fallthru
      _
    // Predicated region
    $region18: #{tpu_custom_call.1} parent=1 // pred_check
      _
    $region19: #{tpu_custom_call.1} parent=1 // pred_check_branch
      %52 = sbr.rel (0) target = $region21
    $region20: #{tpu_custom_call.1} parent=1 // pred_region
      _
    $region21: #{tpu_custom_call.1} parent=1 // pred_fallthru
      _
    // Predicated region
    $region22: #{tpu_custom_call.1} parent=1 // pred_check
      _
    $region23: #{tpu_custom_call.1} parent=1 // pred_check_branch
      %54 = sbr.rel (0) target = $region25
    $region24: #{tpu_custom_call.1} parent=1 // pred_region
      _
    $region25: #{tpu_custom_call.1} parent=1 // pred_fallthru
      _
    // Predicated region
    $region26: #{tpu_custom_call.1} parent=1 // pred_check
      _
    $region27: #{tpu_custom_call.1} parent=1 // pred_check_branch
      %56 = sbr.rel (0) target = $region29
    $region28: #{tpu_custom_call.1} parent=1 // pred_region
      _
    $region29: #{tpu_custom_call.1} parent=1 // pred_fallthru
      _
    // Predicated region
    $region30: #{tpu_custom_call.1} parent=1 // pred_check
      _
    $region31: #{tpu_custom_call.1} parent=1 // pred_check_branch
      %58 = sbr.rel (0) target = $region33
    $region32: #{tpu_custom_call.1} parent=1 // pred_region
      %59 = dma.done [#allocation5], 128
    $region33: #{tpu_custom_call.1} parent=1 // pred_fallthru
      _
    // Predicated region
    $region34: #{tpu_custom_call.1} parent=1 // pred_check
      _
    $region35: #{tpu_custom_call.1} parent=1 // pred_check_branch
      %61 = sbr.rel (0) target = $region37
    $region36: #{tpu_custom_call.1} parent=1 // pred_region
      %62 = dma.done [#allocation8], 2048
    $region37: #{tpu_custom_call.1} parent=1 // pred_fallthru
      _
    // Predicated region
    $region38: #{tpu_custom_call.1} parent=1 // pred_check
      _
    $region39: #{tpu_custom_call.1} parent=1 // pred_check_branch
      %64 = sbr.rel (0) target = $region41
    $region40: #{tpu_custom_call.1} parent=1 // pred_region
      %65 = dma.done [#allocation8], 2048
    $region41: #{tpu_custom_call.1} parent=1 // pred_fallthru
      _
    %v66 = vld [vmem:[#allocation4] sm:$0xff]
    %v67 = vld [vmem:[%s1] sm:$0x1]
    %v69 = vlaneseq
    %v70 = vshrl.u32 %v69, 7
    %v71 = vsub.s32 0, %v70
    %v72 = vrot.slane %v67, %v71
    %v74 = vmul.f32 %v66, %v72
    %v75 = vld [vmem:[#allocation7] sm:$0xff]
    %v76 = vld [vmem:[#allocation7 + $0x8] sm:$0xff]
    %v77 = vld [vmem:[#allocation7 + $0x10] sm:$0xff]
    %v78 = vld [vmem:[#allocation7 + $0x18] sm:$0xff]
    %v79 = vld [vmem:[#allocation7 + $0x20] sm:$0xff]
    %v80 = vld [vmem:[#allocation7 + $0x28] sm:$0xff]
    %v81 = vld [vmem:[#allocation7 + $0x30] sm:$0xff]
    %v82 = vld [vmem:[#allocation7 + $0x38] sm:$0xff]
    %v83 = vld [vmem:[#allocation7 + $0x40] sm:$0xff]
    %v84 = vld [vmem:[#allocation7 + $0x48] sm:$0xff]
    %v85 = vld [vmem:[#allocation7 + $0x50] sm:$0xff]
    %v86 = vld [vmem:[#allocation7 + $0x58] sm:$0xff]
    %v87 = vld [vmem:[#allocation7 + $0x60] sm:$0xff]
    %v88 = vld [vmem:[#allocation7 + $0x68] sm:$0xff]
    %v89 = vld [vmem:[#allocation7 + $0x70] sm:$0xff]
    %v90 = vld [vmem:[#allocation7 + $0x78] sm:$0xff]
    %91 = vmatprep.subr.mxu0 0.0
    %v92 = vand.u32 %v75, 4294901760
    %93 = vmatpush1.xpose.msra.mxu0 %v92
    %94 = vmatprep.subr.mxu0 0.0
    %v95 = vand.u32 %v76, 4294901760
    %96 = vmatpush1.xpose.msra.mxu0 %v95
    %97 = vmatprep.subr.mxu0 0.0
    %v98 = vand.u32 %v77, 4294901760
    %99 = vmatpush1.xpose.msra.mxu0 %v98
    %100 = vmatprep.subr.mxu0 0.0
    %v101 = vand.u32 %v78, 4294901760
    %102 = vmatpush1.xpose.msra.mxu0 %v101
    %103 = vmatprep.subr.mxu0 0.0
    %v104 = vand.u32 %v79, 4294901760
    %105 = vmatpush1.xpose.msra.mxu0 %v104
    %106 = vmatprep.subr.mxu0 0.0
    %v107 = vand.u32 %v80, 4294901760
    %108 = vmatpush1.xpose.msra.mxu0 %v107
    %109 = vmatprep.subr.mxu0 0.0
    %v110 = vand.u32 %v81, 4294901760
    %111 = vmatpush1.xpose.msra.mxu0 %v110
    %112 = vmatprep.subr.mxu0 0.0
    %v113 = vand.u32 %v82, 4294901760
    %114 = vmatpush1.xpose.msra.mxu0 %v113
    %115 = vmatprep.subr.mxu0 0.0
    %v116 = vand.u32 %v83, 4294901760
    %117 = vmatpush1.xpose.msra.mxu0 %v116
    %118 = vmatprep.subr.mxu0 0.0
    %v119 = vand.u32 %v84, 4294901760
    %120 = vmatpush1.xpose.msra.mxu0 %v119
    %121 = vmatprep.subr.mxu0 0.0
    %v122 = vand.u32 %v85, 4294901760
    %123 = vmatpush1.xpose.msra.mxu0 %v122
    %124 = vmatprep.subr.mxu0 0.0
    %v125 = vand.u32 %v86, 4294901760
    %126 = vmatpush1.xpose.msra.mxu0 %v125
    %127 = vmatprep.subr.mxu0 0.0
    %v128 = vand.u32 %v87, 4294901760
    %129 = vmatpush1.xpose.msra.mxu0 %v128
    %130 = vmatprep.subr.mxu0 0.0
    %v131 = vand.u32 %v88, 4294901760
    %132 = vmatpush1.xpose.msra.mxu0 %v131
    %133 = vmatprep.subr.mxu0 0.0
    %v134 = vand.u32 %v89, 4294901760
    %135 = vmatpush1.xpose.msra.mxu0 %v134
    %136 = vmatprep.subr.mxu0 0.0
    %v137 = vand.u32 %v90, 4294901760
    %138 = vmatpush1.xpose.msra.mxu0 %v137
    %139 = vmatprep.subr.mxu0 0.0
    %140 = vmatpush1.xpose.msra.mxu0 0.0
    %141 = vmatprep.subr.mxu0 0.0
    %142 = vmatpush1.xpose.msra.mxu0 0.0
    %143 = vmatprep.subr.mxu0 0.0
    %144 = vmatpush1.xpose.msra.mxu0 0.0
    %145 = vmatprep.subr.mxu0 0.0
    %146 = vmatpush1.xpose.msra.mxu0 0.0
    %147 = vmatprep.subr.mxu0 0.0
    %148 = vmatpush1.xpose.msra.mxu0 0.0
    %149 = vmatprep.subr.mxu0 0.0
    %150 = vmatpush1.xpose.msra.mxu0 0.0
    %151 = vmatprep.subr.mxu0 0.0
    %152 = vmatpush1.xpose.msra.mxu0 0.0
    %153 = vmatprep.subr.mxu0 0.0
    %154 = vmatpush1.xpose.msra.mxu0 0.0
    %155 = vmatprep.subr.mxu0 0.0
    %156 = vmatpush1.xpose.msra.mxu0 0.0
    %157 = vmatprep.subr.mxu0 0.0
    %158 = vmatpush1.xpose.msra.mxu0 0.0
    %159 = vmatprep.subr.mxu0 0.0
    %160 = vmatpush1.xpose.msra.mxu0 0.0
    %161 = vmatprep.subr.mxu0 0.0
    %162 = vmatpush1.xpose.msra.mxu0 0.0
    %163 = vmatprep.subr.mxu0 0.0
    %164 = vmatpush1.xpose.msra.mxu0 0.0
    %165 = vmatprep.subr.mxu0 0.0
    %166 = vmatpush1.xpose.msra.mxu0 0.0
    %167 = vmatprep.subr.mxu0 0.0
    %168 = vmatpush1.xpose.msra.mxu0 0.0
    %169 = vmatprep.subr.mxu0 0.0
    %170 = vmatpush1.xpose.msra.mxu0 0.0
    %171 = vmatprep.mubr.f32.mxu0 0.0
    %v172 = vand.u32 %v66, 4294901760
    %v173 = vsub.f32 %v66, %v172
    %v174 = vand.u32 %v173, 4294901760
    %v175 = vsub.f32 %v173, %v174
    %v176 = vand.u32 %v175, 4294901760
    %177 = vmatmul.mubr.f32.gmra.mrb[0].mxu0 %v176
    %v178 = vpop.f32.mrb[0].mxu0
    %v179 = vadd.f32 0.0, %v178
    %v180 = vpop.f32.mrb[0].mxu0
    %181 = vdwg.mxu0
    %182 = vmatprep.subr.mxu0 0.0
    %v183 = vand.u32 %v75, 4294901760
    %v184 = vsub.f32 %v75, %v183
    %v185 = vand.u32 %v184, 4294901760
    %v186 = vsub.f32 %v184, %v185
    %v187 = vand.u32 %v186, 4294901760
    %188 = vmatpush1.xpose.msra.mxu0 %v187
    %189 = vmatprep.subr.mxu0 0.0
    %v190 = vand.u32 %v76, 4294901760
    %v191 = vsub.f32 %v76, %v190
    %v192 = vand.u32 %v191, 4294901760
    %v193 = vsub.f32 %v191, %v192
    %v194 = vand.u32 %v193, 4294901760
    %195 = vmatpush1.xpose.msra.mxu0 %v194
    %196 = vmatprep.subr.mxu0 0.0
    %v197 = vand.u32 %v77, 4294901760
    %v198 = vsub.f32 %v77, %v197
    %v199 = vand.u32 %v198, 4294901760
    %v200 = vsub.f32 %v198, %v199
    %v201 = vand.u32 %v200, 4294901760
    %202 = vmatpush1.xpose.msra.mxu0 %v201
    %203 = vmatprep.subr.mxu0 0.0
    %v204 = vand.u32 %v78, 4294901760
    %v205 = vsub.f32 %v78, %v204
    %v206 = vand.u32 %v205, 4294901760
    %v207 = vsub.f32 %v205, %v206
    %v208 = vand.u32 %v207, 4294901760
    %209 = vmatpush1.xpose.msra.mxu0 %v208
    %210 = vmatprep.subr.mxu0 0.0
    %v211 = vand.u32 %v79, 4294901760
    %v212 = vsub.f32 %v79, %v211
    %v213 = vand.u32 %v212, 4294901760
    %v214 = vsub.f32 %v212, %v213
    %v215 = vand.u32 %v214, 4294901760
    %216 = vmatpush1.xpose.msra.mxu0 %v215
    %217 = vmatprep.subr.mxu0 0.0
    %v218 = vand.u32 %v80, 4294901760
    %v219 = vsub.f32 %v80, %v218
    %v220 = vand.u32 %v219, 4294901760
    %v221 = vsub.f32 %v219, %v220
    %v222 = vand.u32 %v221, 4294901760
    %223 = vmatpush1.xpose.msra.mxu0 %v222
    %224 = vmatprep.subr.mxu0 0.0
    %v225 = vand.u32 %v81, 4294901760
    %v226 = vsub.f32 %v81, %v225
    %v227 = vand.u32 %v226, 4294901760
    %v228 = vsub.f32 %v226, %v227
    %v229 = vand.u32 %v228, 4294901760
    %230 = vmatpush1.xpose.msra.mxu0 %v229
    %231 = vmatprep.subr.mxu0 0.0
    %v232 = vand.u32 %v82, 4294901760
    %v233 = vsub.f32 %v82, %v232
    %v234 = vand.u32 %v233, 4294901760
    %v235 = vsub.f32 %v233, %v234
    %v236 = vand.u32 %v235, 4294901760
    %237 = vmatpush1.xpose.msra.mxu0 %v236
    %238 = vmatprep.subr.mxu0 0.0
    %v239 = vand.u32 %v83, 4294901760
    %v240 = vsub.f32 %v83, %v239
    %v241 = vand.u32 %v240, 4294901760
    %v242 = vsub.f32 %v240, %v241
    %v243 = vand.u32 %v242, 4294901760
    %244 = vmatpush1.xpose.msra.mxu0 %v243
    %245 = vmatprep.subr.mxu0 0.0
    %v246 = vand.u32 %v84, 4294901760
    %v247 = vsub.f32 %v84, %v246
    %v248 = vand.u32 %v247, 4294901760
    %v249 = vsub.f32 %v247, %v248
    %v250 = vand.u32 %v249, 4294901760
    %251 = vmatpush1.xpose.msra.mxu0 %v250
    %252 = vmatprep.subr.mxu0 0.0
    %v253 = vand.u32 %v85, 4294901760
    %v254 = vsub.f32 %v85, %v253
    %v255 = vand.u32 %v254, 4294901760
    %v256 = vsub.f32 %v254, %v255
    %v257 = vand.u32 %v256, 4294901760
    %258 = vmatpush1.xpose.msra.mxu0 %v257
    %259 = vmatprep.subr.mxu0 0.0
    %v260 = vand.u32 %v86, 4294901760
    %v261 = vsub.f32 %v86, %v260
    %v262 = vand.u32 %v261, 4294901760
    %v263 = vsub.f32 %v261, %v262
    %v264 = vand.u32 %v263, 4294901760
    %265 = vmatpush1.xpose.msra.mxu0 %v264
    %266 = vmatprep.subr.mxu0 0.0
    %v267 = vand.u32 %v87, 4294901760
    %v268 = vsub.f32 %v87, %v267
    %v269 = vand.u32 %v268, 4294901760
    %v270 = vsub.f32 %v268, %v269
    %v271 = vand.u32 %v270, 4294901760
    %272 = vmatpush1.xpose.msra.mxu0 %v271
    %273 = vmatprep.subr.mxu0 0.0
    %v274 = vand.u32 %v88, 4294901760
    %v275 = vsub.f32 %v88, %v274
    %v276 = vand.u32 %v275, 4294901760
    %v277 = vsub.f32 %v275, %v276
    %v278 = vand.u32 %v277, 4294901760
    %279 = vmatpush1.xpose.msra.mxu0 %v278
    %280 = vmatprep.subr.mxu0 0.0
    %v281 = vand.u32 %v89, 4294901760
    %v282 = vsub.f32 %v89, %v281
    %v283 = vand.u32 %v282, 4294901760
    %v284 = vsub.f32 %v282, %v283
    %v285 = vand.u32 %v284, 4294901760
    %286 = vmatpush1.xpose.msra.mxu0 %v285
    %287 = vmatprep.subr.mxu0 0.0
    %v288 = vand.u32 %v90, 4294901760
    %v289 = vsub.f32 %v90, %v288
    %v290 = vand.u32 %v289, 4294901760
    %v291 = vsub.f32 %v289, %v290
    %v292 = vand.u32 %v291, 4294901760
    %293 = vmatpush1.xpose.msra.mxu0 %v292
    %294 = vmatprep.subr.mxu0 0.0
    %295 = vmatpush1.xpose.msra.mxu0 0.0
    %296 = vmatprep.subr.mxu0 0.0
    %297 = vmatpush1.xpose.msra.mxu0 0.0
    %298 = vmatprep.subr.mxu0 0.0
    %299 = vmatpush1.xpose.msra.mxu0 0.0
    %300 = vmatprep.subr.mxu0 0.0
    %301 = vmatpush1.xpose.msra.mxu0 0.0
    %302 = vmatprep.subr.mxu0 0.0
    %303 = vmatpush1.xpose.msra.mxu0 0.0
    %304 = vmatprep.subr.mxu0 0.0
    %305 = vmatpush1.xpose.msra.mxu0 0.0
    %306 = vmatprep.subr.mxu0 0.0
    %307 = vmatpush1.xpose.msra.mxu0 0.0
    %308 = vmatprep.subr.mxu0 0.0
    %309 = vmatpush1.xpose.msra.mxu0 0.0
    %310 = vmatprep.subr.mxu0 0.0
    %311 = vmatpush1.xpose.msra.mxu0 0.0
    %312 = vmatprep.subr.mxu0 0.0
    %313 = vmatpush1.xpose.msra.mxu0 0.0
    %314 = vmatprep.subr.mxu0 0.0
    %315 = vmatpush1.xpose.msra.mxu0 0.0
    %316 = vmatprep.subr.mxu0 0.0
    %317 = vmatpush1.xpose.msra.mxu0 0.0
    %318 = vmatprep.subr.mxu0 0.0
    %319 = vmatpush1.xpose.msra.mxu0 0.0
    %320 = vmatprep.subr.mxu0 0.0
    %321 = vmatpush1.xpose.msra.mxu0 0.0
    %322 = vmatprep.subr.mxu0 0.0
    %323 = vmatpush1.xpose.msra.mxu0 0.0
    %324 = vmatprep.subr.mxu0 0.0
    %325 = vmatpush1.xpose.msra.mxu0 0.0
    %326 = vmatprep.mubr.f32.mxu0 0.0
    %v327 = vand.u32 %v66, 4294901760
    %328 = vmatmul.mubr.f32.gmra.mrb[0].mxu0 %v327
    %v329 = vpop.f32.mrb[0].mxu0
    %v330 = vadd.f32 %v179, %v329
    %v331 = vpop.f32.mrb[0].mxu0
    %332 = vdwg.mxu0
    %333 = vmatprep.subr.mxu0 0.0
    %v334 = vand.u32 %v75, 4294901760
    %v335 = vsub.f32 %v75, %v334
    %336 = vmatpush1.xpose.msra.mxu0 %v335
    %337 = vmatprep.subr.mxu0 0.0
    %v338 = vand.u32 %v76, 4294901760
    %v339 = vsub.f32 %v76, %v338
    %340 = vmatpush1.xpose.msra.mxu0 %v339
    %341 = vmatprep.subr.mxu0 0.0
    %v342 = vand.u32 %v77, 4294901760
    %v343 = vsub.f32 %v77, %v342
    %344 = vmatpush1.xpose.msra.mxu0 %v343
    %345 = vmatprep.subr.mxu0 0.0
    %v346 = vand.u32 %v78, 4294901760
    %v347 = vsub.f32 %v78, %v346
    %348 = vmatpush1.xpose.msra.mxu0 %v347
    %349 = vmatprep.subr.mxu0 0.0
    %v350 = vand.u32 %v79, 4294901760
    %v351 = vsub.f32 %v79, %v350
    %352 = vmatpush1.xpose.msra.mxu0 %v351
    %353 = vmatprep.subr.mxu0 0.0
    %v354 = vand.u32 %v80, 4294901760
    %v355 = vsub.f32 %v80, %v354
    %356 = vmatpush1.xpose.msra.mxu0 %v355
    %357 = vmatprep.subr.mxu0 0.0
    %v358 = vand.u32 %v81, 4294901760
    %v359 = vsub.f32 %v81, %v358
    %360 = vmatpush1.xpose.msra.mxu0 %v359
    %361 = vmatprep.subr.mxu0 0.0
    %v362 = vand.u32 %v82, 4294901760
    %v363 = vsub.f32 %v82, %v362
    %364 = vmatpush1.xpose.msra.mxu0 %v363
    %365 = vmatprep.subr.mxu0 0.0
    %v366 = vand.u32 %v83, 4294901760
    %v367 = vsub.f32 %v83, %v366
    %368 = vmatpush1.xpose.msra.mxu0 %v367
    %369 = vmatprep.subr.mxu0 0.0
    %v370 = vand.u32 %v84, 4294901760
    %v371 = vsub.f32 %v84, %v370
    %372 = vmatpush1.xpose.msra.mxu0 %v371
    %373 = vmatprep.subr.mxu0 0.0
    %v374 = vand.u32 %v85, 4294901760
    %v375 = vsub.f32 %v85, %v374
    %376 = vmatpush1.xpose.msra.mxu0 %v375
    %377 = vmatprep.subr.mxu0 0.0
    %v378 = vand.u32 %v86, 4294901760
    %v379 = vsub.f32 %v86, %v378
    %380 = vmatpush1.xpose.msra.mxu0 %v379
    %381 = vmatprep.subr.mxu0 0.0
    %v382 = vand.u32 %v87, 4294901760
    %v383 = vsub.f32 %v87, %v382
    %384 = vmatpush1.xpose.msra.mxu0 %v383
    %385 = vmatprep.subr.mxu0 0.0
    %v386 = vand.u32 %v88, 4294901760
    %v387 = vsub.f32 %v88, %v386
    %388 = vmatpush1.xpose.msra.mxu0 %v387
    %389 = vmatprep.subr.mxu0 0.0
    %v390 = vand.u32 %v89, 4294901760
    %v391 = vsub.f32 %v89, %v390
    %392 = vmatpush1.xpose.msra.mxu0 %v391
    %393 = vmatprep.subr.mxu0 0.0
    %v394 = vand.u32 %v90, 4294901760
    %v395 = vsub.f32 %v90, %v394
    %396 = vmatpush1.xpose.msra.mxu0 %v395
    %397 = vmatprep.subr.mxu0 0.0
    %398 = vmatpush1.xpose.msra.mxu0 0.0
    %399 = vmatprep.subr.mxu0 0.0
    %400 = vmatpush1.xpose.msra.mxu0 0.0
    %401 = vmatprep.subr.mxu0 0.0
    %402 = vmatpush1.xpose.msra.mxu0 0.0
    %403 = vmatprep.subr.mxu0 0.0
    %404 = vmatpush1.xpose.msra.mxu0 0.0
    %405 = vmatprep.subr.mxu0 0.0
    %406 = vmatpush1.xpose.msra.mxu0 0.0
    %407 = vmatprep.subr.mxu0 0.0
    %408 = vmatpush1.xpose.msra.mxu0 0.0
    %409 = vmatprep.subr.mxu0 0.0
    %410 = vmatpush1.xpose.msra.mxu0 0.0
    %411 = vmatprep.subr.mxu0 0.0
    %412 = vmatpush1.xpose.msra.mxu0 0.0
    %413 = vmatprep.subr.mxu0 0.0
    %414 = vmatpush1.xpose.msra.mxu0 0.0
    %415 = vmatprep.subr.mxu0 0.0
    %416 = vmatpush1.xpose.msra.mxu0 0.0
    %417 = vmatprep.subr.mxu0 0.0
    %418 = vmatpush1.xpose.msra.mxu0 0.0
    %419 = vmatprep.subr.mxu0 0.0
    %420 = vmatpush1.xpose.msra.mxu0 0.0
    %421 = vmatprep.subr.mxu0 0.0
    %422 = vmatpush1.xpose.msra.mxu0 0.0
    %423 = vmatprep.subr.mxu0 0.0
    %424 = vmatpush1.xpose.msra.mxu0 0.0
    %425 = vmatprep.subr.mxu0 0.0
    %426 = vmatpush1.xpose.msra.mxu0 0.0
    %427 = vmatprep.subr.mxu0 0.0
    %428 = vmatpush1.xpose.msra.mxu0 0.0
    %429 = vmatprep.mubr.f32.mxu0 0.0
    %v430 = vand.u32 %v66, 4294901760
    %v431 = vsub.f32 %v66, %v430
    %432 = vmatmul.mubr.f32.gmra.mrb[0].mxu0 %v431
    %v433 = vpop.f32.mrb[0].mxu0
    %v434 = vadd.f32 %v330, %v433
    %v435 = vpop.f32.mrb[0].mxu0
    %436 = vdwg.mxu0
    %437 = vmatprep.subr.mxu0 0.0
    %v438 = vand.u32 %v75, 4294901760
    %439 = vmatpush1.xpose.msra.mxu0 %v438
    %440 = vmatprep.subr.mxu0 0.0
    %v441 = vand.u32 %v76, 4294901760
    %442 = vmatpush1.xpose.msra.mxu0 %v441
    %443 = vmatprep.subr.mxu0 0.0
    %v444 = vand.u32 %v77, 4294901760
    %445 = vmatpush1.xpose.msra.mxu0 %v444
    %446 = vmatprep.subr.mxu0 0.0
    %v447 = vand.u32 %v78, 4294901760
    %448 = vmatpush1.xpose.msra.mxu0 %v447
    %449 = vmatprep.subr.mxu0 0.0
    %v450 = vand.u32 %v79, 4294901760
    %451 = vmatpush1.xpose.msra.mxu0 %v450
    %452 = vmatprep.subr.mxu0 0.0
    %v453 = vand.u32 %v80, 4294901760
    %454 = vmatpush1.xpose.msra.mxu0 %v453
    %455 = vmatprep.subr.mxu0 0.0
    %v456 = vand.u32 %v81, 4294901760
    %457 = vmatpush1.xpose.msra.mxu0 %v456
    %458 = vmatprep.subr.mxu0 0.0
    %v459 = vand.u32 %v82, 4294901760
    %460 = vmatpush1.xpose.msra.mxu0 %v459
    %461 = vmatprep.subr.mxu0 0.0
    %v462 = vand.u32 %v83, 4294901760
    %463 = vmatpush1.xpose.msra.mxu0 %v462
    %464 = vmatprep.subr.mxu0 0.0
    %v465 = vand.u32 %v84, 4294901760
    %466 = vmatpush1.xpose.msra.mxu0 %v465
    %467 = vmatprep.subr.mxu0 0.0
    %v468 = vand.u32 %v85, 4294901760
    %469 = vmatpush1.xpose.msra.mxu0 %v468
    %470 = vmatprep.subr.mxu0 0.0
    %v471 = vand.u32 %v86, 4294901760
    %472 = vmatpush1.xpose.msra.mxu0 %v471
    %473 = vmatprep.subr.mxu0 0.0
    %v474 = vand.u32 %v87, 4294901760
    %475 = vmatpush1.xpose.msra.mxu0 %v474
    %476 = vmatprep.subr.mxu0 0.0
    %v477 = vand.u32 %v88, 4294901760
    %478 = vmatpush1.xpose.msra.mxu0 %v477
    %479 = vmatprep.subr.mxu0 0.0
    %v480 = vand.u32 %v89, 4294901760
    %481 = vmatpush1.xpose.msra.mxu0 %v480
    %482 = vmatprep.subr.mxu0 0.0
    %v483 = vand.u32 %v90, 4294901760
    %484 = vmatpush1.xpose.msra.mxu0 %v483
    %485 = vmatprep.subr.mxu0 0.0
    %486 = vmatpush1.xpose.msra.mxu0 0.0
    %487 = vmatprep.subr.mxu0 0.0
    %488 = vmatpush1.xpose.msra.mxu0 0.0
    %489 = vmatprep.subr.mxu0 0.0
    %490 = vmatpush1.xpose.msra.mxu0 0.0
    %491 = vmatprep.subr.mxu0 0.0
    %492 = vmatpush1.xpose.msra.mxu0 0.0
    %493 = vmatprep.subr.mxu0 0.0
    %494 = vmatpush1.xpose.msra.mxu0 0.0
    %495 = vmatprep.subr.mxu0 0.0
    %496 = vmatpush1.xpose.msra.mxu0 0.0
    %497 = vmatprep.subr.mxu0 0.0
    %498 = vmatpush1.xpose.msra.mxu0 0.0
    %499 = vmatprep.subr.mxu0 0.0
    %500 = vmatpush1.xpose.msra.mxu0 0.0
    %501 = vmatprep.subr.mxu0 0.0
    %502 = vmatpush1.xpose.msra.mxu0 0.0
    %503 = vmatprep.subr.mxu0 0.0
    %504 = vmatpush1.xpose.msra.mxu0 0.0
    %505 = vmatprep.subr.mxu0 0.0
    %506 = vmatpush1.xpose.msra.mxu0 0.0
    %507 = vmatprep.subr.mxu0 0.0
    %508 = vmatpush1.xpose.msra.mxu0 0.0
    %509 = vmatprep.subr.mxu0 0.0
    %510 = vmatpush1.xpose.msra.mxu0 0.0
    %511 = vmatprep.subr.mxu0 0.0
    %512 = vmatpush1.xpose.msra.mxu0 0.0
    %513 = vmatprep.subr.mxu0 0.0
    %514 = vmatpush1.xpose.msra.mxu0 0.0
    %515 = vmatprep.subr.mxu0 0.0
    %516 = vmatpush1.xpose.msra.mxu0 0.0
    %517 = vmatprep.mubr.f32.mxu0 0.0
    %v518 = vand.u32 %v66, 4294901760
    %v519 = vsub.f32 %v66, %v518
    %v520 = vand.u32 %v519, 4294901760
    %521 = vmatmul.mubr.f32.gmra.mrb[0].mxu0 %v520
    %v522 = vpop.f32.mrb[0].mxu0
    %v523 = vadd.f32 %v434, %v522
    %v524 = vpop.f32.mrb[0].mxu0
    %525 = vdwg.mxu0
    %526 = vmatprep.subr.mxu0 0.0
    %v527 = vand.u32 %v75, 4294901760
    %v528 = vsub.f32 %v75, %v527
    %v529 = vand.u32 %v528, 4294901760
    %530 = vmatpush1.xpose.msra.mxu0 %v529
    %531 = vmatprep.subr.mxu0 0.0
    %v532 = vand.u32 %v76, 4294901760
    %v533 = vsub.f32 %v76, %v532
    %v534 = vand.u32 %v533, 4294901760
    %535 = vmatpush1.xpose.msra.mxu0 %v534
    %536 = vmatprep.subr.mxu0 0.0
    %v537 = vand.u32 %v77, 4294901760
    %v538 = vsub.f32 %v77, %v537
    %v539 = vand.u32 %v538, 4294901760
    %540 = vmatpush1.xpose.msra.mxu0 %v539
    %541 = vmatprep.subr.mxu0 0.0
    %v542 = vand.u32 %v78, 4294901760
    %v543 = vsub.f32 %v78, %v542
    %v544 = vand.u32 %v543, 4294901760
    %545 = vmatpush1.xpose.msra.mxu0 %v544
    %546 = vmatprep.subr.mxu0 0.0
    %v547 = vand.u32 %v79, 4294901760
    %v548 = vsub.f32 %v79, %v547
    %v549 = vand.u32 %v548, 4294901760
    %550 = vmatpush1.xpose.msra.mxu0 %v549
    %551 = vmatprep.subr.mxu0 0.0
    %v552 = vand.u32 %v80, 4294901760
    %v553 = vsub.f32 %v80, %v552
    %v554 = vand.u32 %v553, 4294901760
    %555 = vmatpush1.xpose.msra.mxu0 %v554
    %556 = vmatprep.subr.mxu0 0.0
    %v557 = vand.u32 %v81, 4294901760
    %v558 = vsub.f32 %v81, %v557
    %v559 = vand.u32 %v558, 4294901760
    %560 = vmatpush1.xpose.msra.mxu0 %v559
    %561 = vmatprep.subr.mxu0 0.0
    %v562 = vand.u32 %v82, 4294901760
    %v563 = vsub.f32 %v82, %v562
    %v564 = vand.u32 %v563, 4294901760
    %565 = vmatpush1.xpose.msra.mxu0 %v564
    %566 = vmatprep.subr.mxu0 0.0
    %v567 = vand.u32 %v83, 4294901760
    %v568 = vsub.f32 %v83, %v567
    %v569 = vand.u32 %v568, 4294901760
    %570 = vmatpush1.xpose.msra.mxu0 %v569
    %571 = vmatprep.subr.mxu0 0.0
    %v572 = vand.u32 %v84, 4294901760
    %v573 = vsub.f32 %v84, %v572
    %v574 = vand.u32 %v573, 4294901760
    %575 = vmatpush1.xpose.msra.mxu0 %v574
    %576 = vmatprep.subr.mxu0 0.0
    %v577 = vand.u32 %v85, 4294901760
    %v578 = vsub.f32 %v85, %v577
    %v579 = vand.u32 %v578, 4294901760
    %580 = vmatpush1.xpose.msra.mxu0 %v579
    %581 = vmatprep.subr.mxu0 0.0
    %v582 = vand.u32 %v86, 4294901760
    %v583 = vsub.f32 %v86, %v582
    %v584 = vand.u32 %v583, 4294901760
    %585 = vmatpush1.xpose.msra.mxu0 %v584
    %586 = vmatprep.subr.mxu0 0.0
    %v587 = vand.u32 %v87, 4294901760
    %v588 = vsub.f32 %v87, %v587
    %v589 = vand.u32 %v588, 4294901760
    %590 = vmatpush1.xpose.msra.mxu0 %v589
    %591 = vmatprep.subr.mxu0 0.0
    %v592 = vand.u32 %v88, 4294901760
    %v593 = vsub.f32 %v88, %v592
    %v594 = vand.u32 %v593, 4294901760
    %595 = vmatpush1.xpose.msra.mxu0 %v594
    %596 = vmatprep.subr.mxu0 0.0
    %v597 = vand.u32 %v89, 4294901760
    %v598 = vsub.f32 %v89, %v597
    %v599 = vand.u32 %v598, 4294901760
    %600 = vmatpush1.xpose.msra.mxu0 %v599
    %601 = vmatprep.subr.mxu0 0.0
    %v602 = vand.u32 %v90, 4294901760
    %v603 = vsub.f32 %v90, %v602
    %v604 = vand.u32 %v603, 4294901760
    %605 = vmatpush1.xpose.msra.mxu0 %v604
    %606 = vmatprep.subr.mxu0 0.0
    %607 = vmatpush1.xpose.msra.mxu0 0.0
    %608 = vmatprep.subr.mxu0 0.0
    %609 = vmatpush1.xpose.msra.mxu0 0.0
    %610 = vmatprep.subr.mxu0 0.0
    %611 = vmatpush1.xpose.msra.mxu0 0.0
    %612 = vmatprep.subr.mxu0 0.0
    %613 = vmatpush1.xpose.msra.mxu0 0.0
    %614 = vmatprep.subr.mxu0 0.0
    %615 = vmatpush1.xpose.msra.mxu0 0.0
    %616 = vmatprep.subr.mxu0 0.0
    %617 = vmatpush1.xpose.msra.mxu0 0.0
    %618 = vmatprep.subr.mxu0 0.0
    %619 = vmatpush1.xpose.msra.mxu0 0.0
    %620 = vmatprep.subr.mxu0 0.0
    %621 = vmatpush1.xpose.msra.mxu0 0.0
    %622 = vmatprep.subr.mxu0 0.0
    %623 = vmatpush1.xpose.msra.mxu0 0.0
    %624 = vmatprep.subr.mxu0 0.0
    %625 = vmatpush1.xpose.msra.mxu0 0.0
    %626 = vmatprep.subr.mxu0 0.0
    %627 = vmatpush1.xpose.msra.mxu0 0.0
    %628 = vmatprep.subr.mxu0 0.0
    %629 = vmatpush1.xpose.msra.mxu0 0.0
    %630 = vmatprep.subr.mxu0 0.0
    %631 = vmatpush1.xpose.msra.mxu0 0.0
    %632 = vmatprep.subr.mxu0 0.0
    %633 = vmatpush1.xpose.msra.mxu0 0.0
    %634 = vmatprep.subr.mxu0 0.0
    %635 = vmatpush1.xpose.msra.mxu0 0.0
    %636 = vmatprep.subr.mxu0 0.0
    %637 = vmatpush1.xpose.msra.mxu0 0.0
    %638 = vmatprep.mubr.f32.mxu0 0.0
    %v639 = vand.u32 %v66, 4294901760
    %640 = vmatmul.mubr.f32.gmra.mrb[0].mxu0 %v639
    %v641 = vpop.f32.mrb[0].mxu0
    %v642 = vadd.f32 %v523, %v641
    %v643 = vpop.f32.mrb[0].mxu0
    %644 = vdwg.mxu0
    %645 = vmatprep.subr.mxu0 0.0
    %v646 = vand.u32 %v75, 4294901760
    %647 = vmatpush1.xpose.msra.mxu0 %v646
    %648 = vmatprep.subr.mxu0 0.0
    %v649 = vand.u32 %v76, 4294901760
    %650 = vmatpush1.xpose.msra.mxu0 %v649
    %651 = vmatprep.subr.mxu0 0.0
    %v652 = vand.u32 %v77, 4294901760
    %653 = vmatpush1.xpose.msra.mxu0 %v652
    %654 = vmatprep.subr.mxu0 0.0
    %v655 = vand.u32 %v78, 4294901760
    %656 = vmatpush1.xpose.msra.mxu0 %v655
    %657 = vmatprep.subr.mxu0 0.0
    %v658 = vand.u32 %v79, 4294901760
    %659 = vmatpush1.xpose.msra.mxu0 %v658
    %660 = vmatprep.subr.mxu0 0.0
    %v661 = vand.u32 %v80, 4294901760
    %662 = vmatpush1.xpose.msra.mxu0 %v661
    %663 = vmatprep.subr.mxu0 0.0
    %v664 = vand.u32 %v81, 4294901760
    %665 = vmatpush1.xpose.msra.mxu0 %v664
    %666 = vmatprep.subr.mxu0 0.0
    %v667 = vand.u32 %v82, 4294901760
    %668 = vmatpush1.xpose.msra.mxu0 %v667
    %669 = vmatprep.subr.mxu0 0.0
    %v670 = vand.u32 %v83, 4294901760
    %671 = vmatpush1.xpose.msra.mxu0 %v670
    %672 = vmatprep.subr.mxu0 0.0
    %v673 = vand.u32 %v84, 4294901760
    %674 = vmatpush1.xpose.msra.mxu0 %v673
    %675 = vmatprep.subr.mxu0 0.0
    %v676 = vand.u32 %v85, 4294901760
    %677 = vmatpush1.xpose.msra.mxu0 %v676
    %678 = vmatprep.subr.mxu0 0.0
    %v679 = vand.u32 %v86, 4294901760
    %680 = vmatpush1.xpose.msra.mxu0 %v679
    %681 = vmatprep.subr.mxu0 0.0
    %v682 = vand.u32 %v87, 4294901760
    %683 = vmatpush1.xpose.msra.mxu0 %v682
    %684 = vmatprep.subr.mxu0 0.0
    %v685 = vand.u32 %v88, 4294901760
    %686 = vmatpush1.xpose.msra.mxu0 %v685
    %687 = vmatprep.subr.mxu0 0.0
    %v688 = vand.u32 %v89, 4294901760
    %689 = vmatpush1.xpose.msra.mxu0 %v688
    %690 = vmatprep.subr.mxu0 0.0
    %v691 = vand.u32 %v90, 4294901760
    %692 = vmatpush1.xpose.msra.mxu0 %v691
    %693 = vmatprep.subr.mxu0 0.0
    %694 = vmatpush1.xpose.msra.mxu0 0.0
    %695 = vmatprep.subr.mxu0 0.0
    %696 = vmatpush1.xpose.msra.mxu0 0.0
    %697 = vmatprep.subr.mxu0 0.0
    %698 = vmatpush1.xpose.msra.mxu0 0.0
    %699 = vmatprep.subr.mxu0 0.0
    %700 = vmatpush1.xpose.msra.mxu0 0.0
    %701 = vmatprep.subr.mxu0 0.0
    %702 = vmatpush1.xpose.msra.mxu0 0.0
    %703 = vmatprep.subr.mxu0 0.0
    %704 = vmatpush1.xpose.msra.mxu0 0.0
    %705 = vmatprep.subr.mxu0 0.0
    %706 = vmatpush1.xpose.msra.mxu0 0.0
    %707 = vmatprep.subr.mxu0 0.0
    %708 = vmatpush1.xpose.msra.mxu0 0.0
    %709 = vmatprep.subr.mxu0 0.0
    %710 = vmatpush1.xpose.msra.mxu0 0.0
    %711 = vmatprep.subr.mxu0 0.0
    %712 = vmatpush1.xpose.msra.mxu0 0.0
    %713 = vmatprep.subr.mxu0 0.0
    %714 = vmatpush1.xpose.msra.mxu0 0.0
    %715 = vmatprep.subr.mxu0 0.0
    %716 = vmatpush1.xpose.msra.mxu0 0.0
    %717 = vmatprep.subr.mxu0 0.0
    %718 = vmatpush1.xpose.msra.mxu0 0.0
    %719 = vmatprep.subr.mxu0 0.0
    %720 = vmatpush1.xpose.msra.mxu0 0.0
    %721 = vmatprep.subr.mxu0 0.0
    %722 = vmatpush1.xpose.msra.mxu0 0.0
    %723 = vmatprep.subr.mxu0 0.0
    %724 = vmatpush1.xpose.msra.mxu0 0.0
    %725 = vmatprep.mubr.f32.mxu0 0.0
    %v726 = vand.u32 %v66, 4294901760
    %727 = vmatmul.mubr.f32.gmra.mrb[0].mxu0 %v726
    %v728 = vpop.f32.mrb[0].mxu0
    %v729 = vadd.f32 %v642, %v728
    %v730 = vpop.f32.mrb[0].mxu0
    %731 = vdwg.mxu0
    %v732 = vld [vmem:[#allocation9] sm:$0xff]
    %v733 = vld [vmem:[#allocation9 + $0x8] sm:$0xff]
    %v734 = vld [vmem:[#allocation9 + $0x10] sm:$0xff]
    %v735 = vld [vmem:[#allocation9 + $0x18] sm:$0xff]
    %v736 = vld [vmem:[#allocation9 + $0x20] sm:$0xff]
    %v737 = vld [vmem:[#allocation9 + $0x28] sm:$0xff]
    %v738 = vld [vmem:[#allocation9 + $0x30] sm:$0xff]
    %v739 = vld [vmem:[#allocation9 + $0x38] sm:$0xff]
    %v740 = vld [vmem:[#allocation9 + $0x40] sm:$0xff]
    %v741 = vld [vmem:[#allocation9 + $0x48] sm:$0xff]
    %v742 = vld [vmem:[#allocation9 + $0x50] sm:$0xff]
    %v743 = vld [vmem:[#allocation9 + $0x58] sm:$0xff]
    %v744 = vld [vmem:[#allocation9 + $0x60] sm:$0xff]
    %v745 = vld [vmem:[#allocation9 + $0x68] sm:$0xff]
    %v746 = vld [vmem:[#allocation9 + $0x70] sm:$0xff]
    %v747 = vld [vmem:[#allocation9 + $0x78] sm:$0xff]
    %748 = vmatprep.subr.mxu0 0.0
    %v749 = vand.u32 %v732, 4294901760
    %750 = vmatpush1.xpose.msra.mxu0 %v749
    %751 = vmatprep.subr.mxu0 0.0
    %v752 = vand.u32 %v733, 4294901760
    %753 = vmatpush1.xpose.msra.mxu0 %v752
    %754 = vmatprep.subr.mxu0 0.0
    %v755 = vand.u32 %v734, 4294901760
    %756 = vmatpush1.xpose.msra.mxu0 %v755
    %757 = vmatprep.subr.mxu0 0.0
    %v758 = vand.u32 %v735, 4294901760
    %759 = vmatpush1.xpose.msra.mxu0 %v758
    %760 = vmatprep.subr.mxu0 0.0
    %v761 = vand.u32 %v736, 4294901760
    %762 = vmatpush1.xpose.msra.mxu0 %v761
    %763 = vmatprep.subr.mxu0 0.0
    %v764 = vand.u32 %v737, 4294901760
    %765 = vmatpush1.xpose.msra.mxu0 %v764
    %766 = vmatprep.subr.mxu0 0.0
    %v767 = vand.u32 %v738, 4294901760
    %768 = vmatpush1.xpose.msra.mxu0 %v767
    %769 = vmatprep.subr.mxu0 0.0
    %v770 = vand.u32 %v739, 4294901760
    %771 = vmatpush1.xpose.msra.mxu0 %v770
    %772 = vmatprep.subr.mxu0 0.0
    %v773 = vand.u32 %v740, 4294901760
    %774 = vmatpush1.xpose.msra.mxu0 %v773
    %775 = vmatprep.subr.mxu0 0.0
    %v776 = vand.u32 %v741, 4294901760
    %777 = vmatpush1.xpose.msra.mxu0 %v776
    %778 = vmatprep.subr.mxu0 0.0
    %v779 = vand.u32 %v742, 4294901760
    %780 = vmatpush1.xpose.msra.mxu0 %v779
    %781 = vmatprep.subr.mxu0 0.0
    %v782 = vand.u32 %v743, 4294901760
    %783 = vmatpush1.xpose.msra.mxu0 %v782
    %784 = vmatprep.subr.mxu0 0.0
    %v785 = vand.u32 %v744, 4294901760
    %786 = vmatpush1.xpose.msra.mxu0 %v785
    %787 = vmatprep.subr.mxu0 0.0
    %v788 = vand.u32 %v745, 4294901760
    %789 = vmatpush1.xpose.msra.mxu0 %v788
    %790 = vmatprep.subr.mxu0 0.0
    %v791 = vand.u32 %v746, 4294901760
    %792 = vmatpush1.xpose.msra.mxu0 %v791
    %793 = vmatprep.subr.mxu0 0.0
    %v794 = vand.u32 %v747, 4294901760
    %795 = vmatpush1.xpose.msra.mxu0 %v794
    %796 = vmatprep.subr.mxu0 0.0
    %797 = vmatpush1.xpose.msra.mxu0 0.0
    %798 = vmatprep.subr.mxu0 0.0
    %799 = vmatpush1.xpose.msra.mxu0 0.0
    %800 = vmatprep.subr.mxu0 0.0
    %801 = vmatpush1.xpose.msra.mxu0 0.0
    %802 = vmatprep.subr.mxu0 0.0
    %803 = vmatpush1.xpose.msra.mxu0 0.0
    %804 = vmatprep.subr.mxu0 0.0
    %805 = vmatpush1.xpose.msra.mxu0 0.0
    %806 = vmatprep.subr.mxu0 0.0
    %807 = vmatpush1.xpose.msra.mxu0 0.0
    %808 = vmatprep.subr.mxu0 0.0
    %809 = vmatpush1.xpose.msra.mxu0 0.0
    %810 = vmatprep.subr.mxu0 0.0
    %811 = vmatpush1.xpose.msra.mxu0 0.0
    %812 = vmatprep.subr.mxu0 0.0
    %813 = vmatpush1.xpose.msra.mxu0 0.0
    %814 = vmatprep.subr.mxu0 0.0
    %815 = vmatpush1.xpose.msra.mxu0 0.0
    %816 = vmatprep.subr.mxu0 0.0
    %817 = vmatpush1.xpose.msra.mxu0 0.0
    %818 = vmatprep.subr.mxu0 0.0
    %819 = vmatpush1.xpose.msra.mxu0 0.0
    %820 = vmatprep.subr.mxu0 0.0
    %821 = vmatpush1.xpose.msra.mxu0 0.0
    %822 = vmatprep.subr.mxu0 0.0
    %823 = vmatpush1.xpose.msra.mxu0 0.0
    %824 = vmatprep.subr.mxu0 0.0
    %825 = vmatpush1.xpose.msra.mxu0 0.0
    %826 = vmatprep.subr.mxu0 0.0
    %827 = vmatpush1.xpose.msra.mxu0 0.0
    %828 = vmatprep.mubr.f32.mxu0 0.0
    %v829 = vand.u32 %v74, 4294901760
    %v830 = vsub.f32 %v74, %v829
    %v831 = vand.u32 %v830, 4294901760
    %v832 = vsub.f32 %v830, %v831
    %v833 = vand.u32 %v832, 4294901760
    %834 = vmatmul.mubr.f32.gmra.mrb[0].mxu0 %v833
    %v835 = vpop.f32.mrb[0].mxu0
    %v836 = vadd.f32 0.0, %v835
    %v837 = vpop.f32.mrb[0].mxu0
    %838 = vdwg.mxu0
    %839 = vmatprep.subr.mxu0 0.0
    %v840 = vand.u32 %v732, 4294901760
    %v841 = vsub.f32 %v732, %v840
    %v842 = vand.u32 %v841, 4294901760
    %v843 = vsub.f32 %v841, %v842
    %v844 = vand.u32 %v843, 4294901760
    %845 = vmatpush1.xpose.msra.mxu0 %v844
    %846 = vmatprep.subr.mxu0 0.0
    %v847 = vand.u32 %v733, 4294901760
    %v848 = vsub.f32 %v733, %v847
    %v849 = vand.u32 %v848, 4294901760
    %v850 = vsub.f32 %v848, %v849
    %v851 = vand.u32 %v850, 4294901760
    %852 = vmatpush1.xpose.msra.mxu0 %v851
    %853 = vmatprep.subr.mxu0 0.0
    %v854 = vand.u32 %v734, 4294901760
    %v855 = vsub.f32 %v734, %v854
    %v856 = vand.u32 %v855, 4294901760
    %v857 = vsub.f32 %v855, %v856
    %v858 = vand.u32 %v857, 4294901760
    %859 = vmatpush1.xpose.msra.mxu0 %v858
    %860 = vmatprep.subr.mxu0 0.0
    %v861 = vand.u32 %v735, 4294901760
    %v862 = vsub.f32 %v735, %v861
    %v863 = vand.u32 %v862, 4294901760
    %v864 = vsub.f32 %v862, %v863
    %v865 = vand.u32 %v864, 4294901760
    %866 = vmatpush1.xpose.msra.mxu0 %v865
    %867 = vmatprep.subr.mxu0 0.0
    %v868 = vand.u32 %v736, 4294901760
    %v869 = vsub.f32 %v736, %v868
    %v870 = vand.u32 %v869, 4294901760
    %v871 = vsub.f32 %v869, %v870
    %v872 = vand.u32 %v871, 4294901760
    %873 = vmatpush1.xpose.msra.mxu0 %v872
    %874 = vmatprep.subr.mxu0 0.0
    %v875 = vand.u32 %v737, 4294901760
    %v876 = vsub.f32 %v737, %v875
    %v877 = vand.u32 %v876, 4294901760
    %v878 = vsub.f32 %v876, %v877
    %v879 = vand.u32 %v878, 4294901760
    %880 = vmatpush1.xpose.msra.mxu0 %v879
    %881 = vmatprep.subr.mxu0 0.0
    %v882 = vand.u32 %v738, 4294901760
    %v883 = vsub.f32 %v738, %v882
    %v884 = vand.u32 %v883, 4294901760
    %v885 = vsub.f32 %v883, %v884
    %v886 = vand.u32 %v885, 4294901760
    %887 = vmatpush1.xpose.msra.mxu0 %v886
    %888 = vmatprep.subr.mxu0 0.0
    %v889 = vand.u32 %v739, 4294901760
    %v890 = vsub.f32 %v739, %v889
    %v891 = vand.u32 %v890, 4294901760
    %v892 = vsub.f32 %v890, %v891
    %v893 = vand.u32 %v892, 4294901760
    %894 = vmatpush1.xpose.msra.mxu0 %v893
    %895 = vmatprep.subr.mxu0 0.0
    %v896 = vand.u32 %v740, 4294901760
    %v897 = vsub.f32 %v740, %v896
    %v898 = vand.u32 %v897, 4294901760
    %v899 = vsub.f32 %v897, %v898
    %v900 = vand.u32 %v899, 4294901760
    %901 = vmatpush1.xpose.msra.mxu0 %v900
    %902 = vmatprep.subr.mxu0 0.0
    %v903 = vand.u32 %v741, 4294901760
    %v904 = vsub.f32 %v741, %v903
    %v905 = vand.u32 %v904, 4294901760
    %v906 = vsub.f32 %v904, %v905
    %v907 = vand.u32 %v906, 4294901760
    %908 = vmatpush1.xpose.msra.mxu0 %v907
    %909 = vmatprep.subr.mxu0 0.0
    %v910 = vand.u32 %v742, 4294901760
    %v911 = vsub.f32 %v742, %v910
    %v912 = vand.u32 %v911, 4294901760
    %v913 = vsub.f32 %v911, %v912
    %v914 = vand.u32 %v913, 4294901760
    %915 = vmatpush1.xpose.msra.mxu0 %v914
    %916 = vmatprep.subr.mxu0 0.0
    %v917 = vand.u32 %v743, 4294901760
    %v918 = vsub.f32 %v743, %v917
    %v919 = vand.u32 %v918, 4294901760
    %v920 = vsub.f32 %v918, %v919
    %v921 = vand.u32 %v920, 4294901760
    %922 = vmatpush1.xpose.msra.mxu0 %v921
    %923 = vmatprep.subr.mxu0 0.0
    %v924 = vand.u32 %v744, 4294901760
    %v925 = vsub.f32 %v744, %v924
    %v926 = vand.u32 %v925, 4294901760
    %v927 = vsub.f32 %v925, %v926
    %v928 = vand.u32 %v927, 4294901760
    %929 = vmatpush1.xpose.msra.mxu0 %v928
    %930 = vmatprep.subr.mxu0 0.0
    %v931 = vand.u32 %v745, 4294901760
    %v932 = vsub.f32 %v745, %v931
    %v933 = vand.u32 %v932, 4294901760
    %v934 = vsub.f32 %v932, %v933
    %v935 = vand.u32 %v934, 4294901760
    %936 = vmatpush1.xpose.msra.mxu0 %v935
    %937 = vmatprep.subr.mxu0 0.0
    %v938 = vand.u32 %v746, 4294901760
    %v939 = vsub.f32 %v746, %v938
    %v940 = vand.u32 %v939, 4294901760
    %v941 = vsub.f32 %v939, %v940
    %v942 = vand.u32 %v941, 4294901760
    %943 = vmatpush1.xpose.msra.mxu0 %v942
    %944 = vmatprep.subr.mxu0 0.0
    %v945 = vand.u32 %v747, 4294901760
    %v946 = vsub.f32 %v747, %v945
    %v947 = vand.u32 %v946, 4294901760
    %v948 = vsub.f32 %v946, %v947
    %v949 = vand.u32 %v948, 4294901760
    %950 = vmatpush1.xpose.msra.mxu0 %v949
    %951 = vmatprep.subr.mxu0 0.0
    %952 = vmatpush1.xpose.msra.mxu0 0.0
    %953 = vmatprep.subr.mxu0 0.0
    %954 = vmatpush1.xpose.msra.mxu0 0.0
    %955 = vmatprep.subr.mxu0 0.0
    %956 = vmatpush1.xpose.msra.mxu0 0.0
    %957 = vmatprep.subr.mxu0 0.0
    %958 = vmatpush1.xpose.msra.mxu0 0.0
    %959 = vmatprep.subr.mxu0 0.0
    %960 = vmatpush1.xpose.msra.mxu0 0.0
    %961 = vmatprep.subr.mxu0 0.0
    %962 = vmatpush1.xpose.msra.mxu0 0.0
    %963 = vmatprep.subr.mxu0 0.0
    %964 = vmatpush1.xpose.msra.mxu0 0.0
    %965 = vmatprep.subr.mxu0 0.0
    %966 = vmatpush1.xpose.msra.mxu0 0.0
    %967 = vmatprep.subr.mxu0 0.0
    %968 = vmatpush1.xpose.msra.mxu0 0.0
    %969 = vmatprep.subr.mxu0 0.0
    %970 = vmatpush1.xpose.msra.mxu0 0.0
    %971 = vmatprep.subr.mxu0 0.0
    %972 = vmatpush1.xpose.msra.mxu0 0.0
    %973 = vmatprep.subr.mxu0 0.0
    %974 = vmatpush1.xpose.msra.mxu0 0.0
    %975 = vmatprep.subr.mxu0 0.0
    %976 = vmatpush1.xpose.msra.mxu0 0.0
    %977 = vmatprep.subr.mxu0 0.0
    %978 = vmatpush1.xpose.msra.mxu0 0.0
    %979 = vmatprep.subr.mxu0 0.0
    %980 = vmatpush1.xpose.msra.mxu0 0.0
    %981 = vmatprep.subr.mxu0 0.0
    %982 = vmatpush1.xpose.msra.mxu0 0.0
    %983 = vmatprep.mubr.f32.mxu0 0.0
    %v984 = vand.u32 %v74, 4294901760
    %985 = vmatmul.mubr.f32.gmra.mrb[0].mxu0 %v984
    %v986 = vpop.f32.mrb[0].mxu0
    %v987 = vadd.f32 %v836, %v986
    %v988 = vpop.f32.mrb[0].mxu0
    %989 = vdwg.mxu0
    %990 = vmatprep.subr.mxu0 0.0
    %v991 = vand.u32 %v732, 4294901760
    %v992 = vsub.f32 %v732, %v991
    %993 = vmatpush1.xpose.msra.mxu0 %v992
    %994 = vmatprep.subr.mxu0 0.0
    %v995 = vand.u32 %v733, 4294901760
    %v996 = vsub.f32 %v733, %v995
    %997 = vmatpush1.xpose.msra.mxu0 %v996
    %998 = vmatprep.subr.mxu0 0.0
    %v999 = vand.u32 %v734, 4294901760
    %v1000 = vsub.f32 %v734, %v999
    %1001 = vmatpush1.xpose.msra.mxu0 %v1000
    %1002 = vmatprep.subr.mxu0 0.0
    %v1003 = vand.u32 %v735, 4294901760
    %v1004 = vsub.f32 %v735, %v1003
    %1005 = vmatpush1.xpose.msra.mxu0 %v1004
    %1006 = vmatprep.subr.mxu0 0.0
    %v1007 = vand.u32 %v736, 4294901760
    %v1008 = vsub.f32 %v736, %v1007
    %1009 = vmatpush1.xpose.msra.mxu0 %v1008
    %1010 = vmatprep.subr.mxu0 0.0
    %v1011 = vand.u32 %v737, 4294901760
    %v1012 = vsub.f32 %v737, %v1011
    %1013 = vmatpush1.xpose.msra.mxu0 %v1012
    %1014 = vmatprep.subr.mxu0 0.0
    %v1015 = vand.u32 %v738, 4294901760
    %v1016 = vsub.f32 %v738, %v1015
    %1017 = vmatpush1.xpose.msra.mxu0 %v1016
    %1018 = vmatprep.subr.mxu0 0.0
    %v1019 = vand.u32 %v739, 4294901760
    %v1020 = vsub.f32 %v739, %v1019
    %1021 = vmatpush1.xpose.msra.mxu0 %v1020
    %1022 = vmatprep.subr.mxu0 0.0
    %v1023 = vand.u32 %v740, 4294901760
    %v1024 = vsub.f32 %v740, %v1023
    %1025 = vmatpush1.xpose.msra.mxu0 %v1024
    %1026 = vmatprep.subr.mxu0 0.0
    %v1027 = vand.u32 %v741, 4294901760
    %v1028 = vsub.f32 %v741, %v1027
    %1029 = vmatpush1.xpose.msra.mxu0 %v1028
    %1030 = vmatprep.subr.mxu0 0.0
    %v1031 = vand.u32 %v742, 4294901760
    %v1032 = vsub.f32 %v742, %v1031
    %1033 = vmatpush1.xpose.msra.mxu0 %v1032
    %1034 = vmatprep.subr.mxu0 0.0
    %v1035 = vand.u32 %v743, 4294901760
    %v1036 = vsub.f32 %v743, %v1035
    %1037 = vmatpush1.xpose.msra.mxu0 %v1036
    %1038 = vmatprep.subr.mxu0 0.0
    %v1039 = vand.u32 %v744, 4294901760
    %v1040 = vsub.f32 %v744, %v1039
    %1041 = vmatpush1.xpose.msra.mxu0 %v1040
    %1042 = vmatprep.subr.mxu0 0.0
    %v1043 = vand.u32 %v745, 4294901760
    %v1044 = vsub.f32 %v745, %v1043
    %1045 = vmatpush1.xpose.msra.mxu0 %v1044
    %1046 = vmatprep.subr.mxu0 0.0
    %v1047 = vand.u32 %v746, 4294901760
    %v1048 = vsub.f32 %v746, %v1047
    %1049 = vmatpush1.xpose.msra.mxu0 %v1048
    %1050 = vmatprep.subr.mxu0 0.0
    %v1051 = vand.u32 %v747, 4294901760
    %v1052 = vsub.f32 %v747, %v1051
    %1053 = vmatpush1.xpose.msra.mxu0 %v1052
    %1054 = vmatprep.subr.mxu0 0.0
    %1055 = vmatpush1.xpose.msra.mxu0 0.0
    %1056 = vmatprep.subr.mxu0 0.0
    %1057 = vmatpush1.xpose.msra.mxu0 0.0
    %1058 = vmatprep.subr.mxu0 0.0
    %1059 = vmatpush1.xpose.msra.mxu0 0.0
    %1060 = vmatprep.subr.mxu0 0.0
    %1061 = vmatpush1.xpose.msra.mxu0 0.0
    %1062 = vmatprep.subr.mxu0 0.0
    %1063 = vmatpush1.xpose.msra.mxu0 0.0
    %1064 = vmatprep.subr.mxu0 0.0
    %1065 = vmatpush1.xpose.msra.mxu0 0.0
    %1066 = vmatprep.subr.mxu0 0.0
    %1067 = vmatpush1.xpose.msra.mxu0 0.0
    %1068 = vmatprep.subr.mxu0 0.0
    %1069 = vmatpush1.xpose.msra.mxu0 0.0
    %1070 = vmatprep.subr.mxu0 0.0
    %1071 = vmatpush1.xpose.msra.mxu0 0.0
    %1072 = vmatprep.subr.mxu0 0.0
    %1073 = vmatpush1.xpose.msra.mxu0 0.0
    %1074 = vmatprep.subr.mxu0 0.0
    %1075 = vmatpush1.xpose.msra.mxu0 0.0
    %1076 = vmatprep.subr.mxu0 0.0
    %1077 = vmatpush1.xpose.msra.mxu0 0.0
    %1078 = vmatprep.subr.mxu0 0.0
    %1079 = vmatpush1.xpose.msra.mxu0 0.0
    %1080 = vmatprep.subr.mxu0 0.0
    %1081 = vmatpush1.xpose.msra.mxu0 0.0
    %1082 = vmatprep.subr.mxu0 0.0
    %1083 = vmatpush1.xpose.msra.mxu0 0.0
    %1084 = vmatprep.subr.mxu0 0.0
    %1085 = vmatpush1.xpose.msra.mxu0 0.0
    %1086 = vmatprep.mubr.f32.mxu0 0.0
    %v1087 = vand.u32 %v74, 4294901760
    %v1088 = vsub.f32 %v74, %v1087
    %1089 = vmatmul.mubr.f32.gmra.mrb[0].mxu0 %v1088
    %v1090 = vpop.f32.mrb[0].mxu0
    %v1091 = vadd.f32 %v987, %v1090
    %v1092 = vpop.f32.mrb[0].mxu0
    %1093 = vdwg.mxu0
    %1094 = vmatprep.subr.mxu0 0.0
    %v1095 = vand.u32 %v732, 4294901760
    %1096 = vmatpush1.xpose.msra.mxu0 %v1095
    %1097 = vmatprep.subr.mxu0 0.0
    %v1098 = vand.u32 %v733, 4294901760
    %1099 = vmatpush1.xpose.msra.mxu0 %v1098
    %1100 = vmatprep.subr.mxu0 0.0
    %v1101 = vand.u32 %v734, 4294901760
    %1102 = vmatpush1.xpose.msra.mxu0 %v1101
    %1103 = vmatprep.subr.mxu0 0.0
    %v1104 = vand.u32 %v735, 4294901760
    %1105 = vmatpush1.xpose.msra.mxu0 %v1104
    %1106 = vmatprep.subr.mxu0 0.0
    %v1107 = vand.u32 %v736, 4294901760
    %1108 = vmatpush1.xpose.msra.mxu0 %v1107
    %1109 = vmatprep.subr.mxu0 0.0
    %v1110 = vand.u32 %v737, 4294901760
    %1111 = vmatpush1.xpose.msra.mxu0 %v1110
    %1112 = vmatprep.subr.mxu0 0.0
    %v1113 = vand.u32 %v738, 4294901760
    %1114 = vmatpush1.xpose.msra.mxu0 %v1113
    %1115 = vmatprep.subr.mxu0 0.0
    %v1116 = vand.u32 %v739, 4294901760
    %1117 = vmatpush1.xpose.msra.mxu0 %v1116
    %1118 = vmatprep.subr.mxu0 0.0
    %v1119 = vand.u32 %v740, 4294901760
    %1120 = vmatpush1.xpose.msra.mxu0 %v1119
    %1121 = vmatprep.subr.mxu0 0.0
    %v1122 = vand.u32 %v741, 4294901760
    %1123 = vmatpush1.xpose.msra.mxu0 %v1122
    %1124 = vmatprep.subr.mxu0 0.0
    %v1125 = vand.u32 %v742, 4294901760
    %1126 = vmatpush1.xpose.msra.mxu0 %v1125
    %1127 = vmatprep.subr.mxu0 0.0
    %v1128 = vand.u32 %v743, 4294901760
    %1129 = vmatpush1.xpose.msra.mxu0 %v1128
    %1130 = vmatprep.subr.mxu0 0.0
    %v1131 = vand.u32 %v744, 4294901760
    %1132 = vmatpush1.xpose.msra.mxu0 %v1131
    %1133 = vmatprep.subr.mxu0 0.0
    %v1134 = vand.u32 %v745, 4294901760
    %1135 = vmatpush1.xpose.msra.mxu0 %v1134
    %1136 = vmatprep.subr.mxu0 0.0
    %v1137 = vand.u32 %v746, 4294901760
    %1138 = vmatpush1.xpose.msra.mxu0 %v1137
    %1139 = vmatprep.subr.mxu0 0.0
    %v1140 = vand.u32 %v747, 4294901760
    %1141 = vmatpush1.xpose.msra.mxu0 %v1140
    %1142 = vmatprep.subr.mxu0 0.0
    %1143 = vmatpush1.xpose.msra.mxu0 0.0
    %1144 = vmatprep.subr.mxu0 0.0
    %1145 = vmatpush1.xpose.msra.mxu0 0.0
    %1146 = vmatprep.subr.mxu0 0.0
    %1147 = vmatpush1.xpose.msra.mxu0 0.0
    %1148 = vmatprep.subr.mxu0 0.0
    %1149 = vmatpush1.xpose.msra.mxu0 0.0
    %1150 = vmatprep.subr.mxu0 0.0
    %1151 = vmatpush1.xpose.msra.mxu0 0.0
    %1152 = vmatprep.subr.mxu0 0.0
    %1153 = vmatpush1.xpose.msra.mxu0 0.0
    %1154 = vmatprep.subr.mxu0 0.0
    %1155 = vmatpush1.xpose.msra.mxu0 0.0
    %1156 = vmatprep.subr.mxu0 0.0
    %1157 = vmatpush1.xpose.msra.mxu0 0.0
    %1158 = vmatprep.subr.mxu0 0.0
    %1159 = vmatpush1.xpose.msra.mxu0 0.0
    %1160 = vmatprep.subr.mxu0 0.0
    %1161 = vmatpush1.xpose.msra.mxu0 0.0
    %1162 = vmatprep.subr.mxu0 0.0
    %1163 = vmatpush1.xpose.msra.mxu0 0.0
    %1164 = vmatprep.subr.mxu0 0.0
    %1165 = vmatpush1.xpose.msra.mxu0 0.0
    %1166 = vmatprep.subr.mxu0 0.0
    %1167 = vmatpush1.xpose.msra.mxu0 0.0
    %1168 = vmatprep.subr.mxu0 0.0
    %1169 = vmatpush1.xpose.msra.mxu0 0.0
    %1170 = vmatprep.subr.mxu0 0.0
    %1171 = vmatpush1.xpose.msra.mxu0 0.0
    %1172 = vmatprep.subr.mxu0 0.0
    %1173 = vmatpush1.xpose.msra.mxu0 0.0
    %1174 = vmatprep.mubr.f32.mxu0 0.0
    %v1175 = vand.u32 %v74, 4294901760
    %v1176 = vsub.f32 %v74, %v1175
    %v1177 = vand.u32 %v1176, 4294901760
    %1178 = vmatmul.mubr.f32.gmra.mrb[0].mxu0 %v1177
    %v1179 = vpop.f32.mrb[0].mxu0
    %v1180 = vadd.f32 %v1091, %v1179
    %v1181 = vpop.f32.mrb[0].mxu0
    %1182 = vdwg.mxu0
    %1183 = vmatprep.subr.mxu0 0.0
    %v1184 = vand.u32 %v732, 4294901760
    %v1185 = vsub.f32 %v732, %v1184
    %v1186 = vand.u32 %v1185, 4294901760
    %1187 = vmatpush1.xpose.msra.mxu0 %v1186
    %1188 = vmatprep.subr.mxu0 0.0
    %v1189 = vand.u32 %v733, 4294901760
    %v1190 = vsub.f32 %v733, %v1189
    %v1191 = vand.u32 %v1190, 4294901760
    %1192 = vmatpush1.xpose.msra.mxu0 %v1191
    %1193 = vmatprep.subr.mxu0 0.0
    %v1194 = vand.u32 %v734, 4294901760
    %v1195 = vsub.f32 %v734, %v1194
    %v1196 = vand.u32 %v1195, 4294901760
    %1197 = vmatpush1.xpose.msra.mxu0 %v1196
    %1198 = vmatprep.subr.mxu0 0.0
    %v1199 = vand.u32 %v735, 4294901760
    %v1200 = vsub.f32 %v735, %v1199
    %v1201 = vand.u32 %v1200, 4294901760
    %1202 = vmatpush1.xpose.msra.mxu0 %v1201
    %1203 = vmatprep.subr.mxu0 0.0
    %v1204 = vand.u32 %v736, 4294901760
    %v1205 = vsub.f32 %v736, %v1204
    %v1206 = vand.u32 %v1205, 4294901760
    %1207 = vmatpush1.xpose.msra.mxu0 %v1206
    %1208 = vmatprep.subr.mxu0 0.0
    %v1209 = vand.u32 %v737, 4294901760
    %v1210 = vsub.f32 %v737, %v1209
    %v1211 = vand.u32 %v1210, 4294901760
    %1212 = vmatpush1.xpose.msra.mxu0 %v1211
    %1213 = vmatprep.subr.mxu0 0.0
    %v1214 = vand.u32 %v738, 4294901760
    %v1215 = vsub.f32 %v738, %v1214
    %v1216 = vand.u32 %v1215, 4294901760
    %1217 = vmatpush1.xpose.msra.mxu0 %v1216
    %1218 = vmatprep.subr.mxu0 0.0
    %v1219 = vand.u32 %v739, 4294901760
    %v1220 = vsub.f32 %v739, %v1219
    %v1221 = vand.u32 %v1220, 4294901760
    %1222 = vmatpush1.xpose.msra.mxu0 %v1221
    %1223 = vmatprep.subr.mxu0 0.0
    %v1224 = vand.u32 %v740, 4294901760
    %v1225 = vsub.f32 %v740, %v1224
    %v1226 = vand.u32 %v1225, 4294901760
    %1227 = vmatpush1.xpose.msra.mxu0 %v1226
    %1228 = vmatprep.subr.mxu0 0.0
    %v1229 = vand.u32 %v741, 4294901760
    %v1230 = vsub.f32 %v741, %v1229
    %v1231 = vand.u32 %v1230, 4294901760
    %1232 = vmatpush1.xpose.msra.mxu0 %v1231
    %1233 = vmatprep.subr.mxu0 0.0
    %v1234 = vand.u32 %v742, 4294901760
    %v1235 = vsub.f32 %v742, %v1234
    %v1236 = vand.u32 %v1235, 4294901760
    %1237 = vmatpush1.xpose.msra.mxu0 %v1236
    %1238 = vmatprep.subr.mxu0 0.0
    %v1239 = vand.u32 %v743, 4294901760
    %v1240 = vsub.f32 %v743, %v1239
    %v1241 = vand.u32 %v1240, 4294901760
    %1242 = vmatpush1.xpose.msra.mxu0 %v1241
    %1243 = vmatprep.subr.mxu0 0.0
    %v1244 = vand.u32 %v744, 4294901760
    %v1245 = vsub.f32 %v744, %v1244
    %v1246 = vand.u32 %v1245, 4294901760
    %1247 = vmatpush1.xpose.msra.mxu0 %v1246
    %1248 = vmatprep.subr.mxu0 0.0
    %v1249 = vand.u32 %v745, 4294901760
    %v1250 = vsub.f32 %v745, %v1249
    %v1251 = vand.u32 %v1250, 4294901760
    %1252 = vmatpush1.xpose.msra.mxu0 %v1251
    %1253 = vmatprep.subr.mxu0 0.0
    %v1254 = vand.u32 %v746, 4294901760
    %v1255 = vsub.f32 %v746, %v1254
    %v1256 = vand.u32 %v1255, 4294901760
    %1257 = vmatpush1.xpose.msra.mxu0 %v1256
    %1258 = vmatprep.subr.mxu0 0.0
    %v1259 = vand.u32 %v747, 4294901760
    %v1260 = vsub.f32 %v747, %v1259
    %v1261 = vand.u32 %v1260, 4294901760
    %1262 = vmatpush1.xpose.msra.mxu0 %v1261
    %1263 = vmatprep.subr.mxu0 0.0
    %1264 = vmatpush1.xpose.msra.mxu0 0.0
    %1265 = vmatprep.subr.mxu0 0.0
    %1266 = vmatpush1.xpose.msra.mxu0 0.0
    %1267 = vmatprep.subr.mxu0 0.0
    %1268 = vmatpush1.xpose.msra.mxu0 0.0
    %1269 = vmatprep.subr.mxu0 0.0
    %1270 = vmatpush1.xpose.msra.mxu0 0.0
    %1271 = vmatprep.subr.mxu0 0.0
    %1272 = vmatpush1.xpose.msra.mxu0 0.0
    %1273 = vmatprep.subr.mxu0 0.0
    %1274 = vmatpush1.xpose.msra.mxu0 0.0
    %1275 = vmatprep.subr.mxu0 0.0
    %1276 = vmatpush1.xpose.msra.mxu0 0.0
    %1277 = vmatprep.subr.mxu0 0.0
    %1278 = vmatpush1.xpose.msra.mxu0 0.0
    %1279 = vmatprep.subr.mxu0 0.0
    %1280 = vmatpush1.xpose.msra.mxu0 0.0
    %1281 = vmatprep.subr.mxu0 0.0
    %1282 = vmatpush1.xpose.msra.mxu0 0.0
    %1283 = vmatprep.subr.mxu0 0.0
    %1284 = vmatpush1.xpose.msra.mxu0 0.0
    %1285 = vmatprep.subr.mxu0 0.0
    %1286 = vmatpush1.xpose.msra.mxu0 0.0
    %1287 = vmatprep.subr.mxu0 0.0
    %1288 = vmatpush1.xpose.msra.mxu0 0.0
    %1289 = vmatprep.subr.mxu0 0.0
    %1290 = vmatpush1.xpose.msra.mxu0 0.0
    %1291 = vmatprep.subr.mxu0 0.0
    %1292 = vmatpush1.xpose.msra.mxu0 0.0
    %1293 = vmatprep.subr.mxu0 0.0
    %1294 = vmatpush1.xpose.msra.mxu0 0.0
    %1295 = vmatprep.mubr.f32.mxu0 0.0
    %v1296 = vand.u32 %v74, 4294901760
    %1297 = vmatmul.mubr.f32.gmra.mrb[0].mxu0 %v1296
    %v1298 = vpop.f32.mrb[0].mxu0
    %v1299 = vadd.f32 %v1180, %v1298
    %v1300 = vpop.f32.mrb[0].mxu0
    %1301 = vdwg.mxu0
    %1302 = vmatprep.subr.mxu0 0.0
    %v1303 = vand.u32 %v732, 4294901760
    %1304 = vmatpush1.xpose.msra.mxu0 %v1303
    %1305 = vmatprep.subr.mxu0 0.0
    %v1306 = vand.u32 %v733, 4294901760
    %1307 = vmatpush1.xpose.msra.mxu0 %v1306
    %1308 = vmatprep.subr.mxu0 0.0
    %v1309 = vand.u32 %v734, 4294901760
    %1310 = vmatpush1.xpose.msra.mxu0 %v1309
    %1311 = vmatprep.subr.mxu0 0.0
    %v1312 = vand.u32 %v735, 4294901760
    %1313 = vmatpush1.xpose.msra.mxu0 %v1312
    %1314 = vmatprep.subr.mxu0 0.0
    %v1315 = vand.u32 %v736, 4294901760
    %1316 = vmatpush1.xpose.msra.mxu0 %v1315
    %1317 = vmatprep.subr.mxu0 0.0
    %v1318 = vand.u32 %v737, 4294901760
    %1319 = vmatpush1.xpose.msra.mxu0 %v1318
    %1320 = vmatprep.subr.mxu0 0.0
    %v1321 = vand.u32 %v738, 4294901760
    %1322 = vmatpush1.xpose.msra.mxu0 %v1321
    %1323 = vmatprep.subr.mxu0 0.0
    %v1324 = vand.u32 %v739, 4294901760
    %1325 = vmatpush1.xpose.msra.mxu0 %v1324
    %1326 = vmatprep.subr.mxu0 0.0
    %v1327 = vand.u32 %v740, 4294901760
    %1328 = vmatpush1.xpose.msra.mxu0 %v1327
    %1329 = vmatprep.subr.mxu0 0.0
    %v1330 = vand.u32 %v741, 4294901760
    %1331 = vmatpush1.xpose.msra.mxu0 %v1330
    %1332 = vmatprep.subr.mxu0 0.0
    %v1333 = vand.u32 %v742, 4294901760
    %1334 = vmatpush1.xpose.msra.mxu0 %v1333
    %1335 = vmatprep.subr.mxu0 0.0
    %v1336 = vand.u32 %v743, 4294901760
    %1337 = vmatpush1.xpose.msra.mxu0 %v1336
    %1338 = vmatprep.subr.mxu0 0.0
    %v1339 = vand.u32 %v744, 4294901760
    %1340 = vmatpush1.xpose.msra.mxu0 %v1339
    %1341 = vmatprep.subr.mxu0 0.0
    %v1342 = vand.u32 %v745, 4294901760
    %1343 = vmatpush1.xpose.msra.mxu0 %v1342
    %1344 = vmatprep.subr.mxu0 0.0
    %v1345 = vand.u32 %v746, 4294901760
    %1346 = vmatpush1.xpose.msra.mxu0 %v1345
    %1347 = vmatprep.subr.mxu0 0.0
    %v1348 = vand.u32 %v747, 4294901760
    %1349 = vmatpush1.xpose.msra.mxu0 %v1348
    %1350 = vmatprep.subr.mxu0 0.0
    %1351 = vmatpush1.xpose.msra.mxu0 0.0
    %1352 = vmatprep.subr.mxu0 0.0
    %1353 = vmatpush1.xpose.msra.mxu0 0.0
    %1354 = vmatprep.subr.mxu0 0.0
    %1355 = vmatpush1.xpose.msra.mxu0 0.0
    %1356 = vmatprep.subr.mxu0 0.0
    %1357 = vmatpush1.xpose.msra.mxu0 0.0
    %1358 = vmatprep.subr.mxu0 0.0
    %1359 = vmatpush1.xpose.msra.mxu0 0.0
    %1360 = vmatprep.subr.mxu0 0.0
    %1361 = vmatpush1.xpose.msra.mxu0 0.0
    %1362 = vmatprep.subr.mxu0 0.0
    %1363 = vmatpush1.xpose.msra.mxu0 0.0
    %1364 = vmatprep.subr.mxu0 0.0
    %1365 = vmatpush1.xpose.msra.mxu0 0.0
    %1366 = vmatprep.subr.mxu0 0.0
    %1367 = vmatpush1.xpose.msra.mxu0 0.0
    %1368 = vmatprep.subr.mxu0 0.0
    %1369 = vmatpush1.xpose.msra.mxu0 0.0
    %1370 = vmatprep.subr.mxu0 0.0
    %1371 = vmatpush1.xpose.msra.mxu0 0.0
    %1372 = vmatprep.subr.mxu0 0.0
    %1373 = vmatpush1.xpose.msra.mxu0 0.0
    %1374 = vmatprep.subr.mxu0 0.0
    %1375 = vmatpush1.xpose.msra.mxu0 0.0
    %1376 = vmatprep.subr.mxu0 0.0
    %1377 = vmatpush1.xpose.msra.mxu0 0.0
    %1378 = vmatprep.subr.mxu0 0.0
    %1379 = vmatpush1.xpose.msra.mxu0 0.0
    %1380 = vmatprep.subr.mxu0 0.0
    %1381 = vmatpush1.xpose.msra.mxu0 0.0
    %1382 = vmatprep.mubr.f32.mxu0 0.0
    %v1383 = vand.u32 %v74, 4294901760
    %1384 = vmatmul.mubr.f32.gmra.mrb[0].mxu0 %v1383
    %v1385 = vpop.f32.mrb[0].mxu0
    %v1386 = vadd.f32 %v1299, %v1385
    %v1387 = vpop.f32.mrb[0].mxu0
    %1388 = vdwg.mxu0
    %p1389 = scmp.eq.s32.totalorder 0, 0
    // Predicated region
    $region42: #{tpu_custom_call.1} parent=1 // pred_check
      %p1390 = pneg %p1389
    $region43: #{tpu_custom_call.1} parent=1 // pred_check_branch
      %1392 = sbr.rel (%p1390) target = $region45
    $region44: #{tpu_custom_call.1} parent=1 // pred_region
      %1393 = vst [vmem:[#allocation2] sm:$0xff] %v729
      %1394 = vst [vmem:[#allocation3] sm:$0xff] %v1386
    $region45: #{tpu_custom_call.1} parent=1 // pred_fallthru
      _
    %p1395 = scmp.gt.s32.totalorder 0, 0
    // Predicated region
    $region46: #{tpu_custom_call.1} parent=1 // pred_check
      %p1396 = pneg %p1395
    $region47: #{tpu_custom_call.1} parent=1 // pred_check_branch
      %1398 = sbr.rel (%p1396) target = $region49
    $region48: #{tpu_custom_call.1} parent=1 // pred_region
      %v1399 = vld [vmem:[#allocation2] sm:$0xff]
      %v1400 = vadd.f32 %v1399, %v729
      %1401 = vst [vmem:[#allocation2] sm:$0xff] %v1400
      %v1402 = vld [vmem:[#allocation3] sm:$0xff]
      %v1403 = vadd.f32 %v1402, %v1386
      %1404 = vst [vmem:[#allocation3] sm:$0xff] %v1403
    $region49: #{tpu_custom_call.1} parent=1 // pred_fallthru
      _
    // Predicated region
    $region50: #{tpu_custom_call.1} parent=1 // pred_check
      %p1405 = pneg %p1389
    $region51: #{tpu_custom_call.1} parent=1 // pred_check_branch
      %1407 = sbr.rel (%p1405) target = $region53
    $region52: #{tpu_custom_call.1} parent=1 // pred_region
      %v1408 = vld [vmem:[%s6] sm:$0x1]
      %v1409 = vld [vmem:[%s4] sm:$0x1]
      %v1410 = vld [vmem:[%s5] sm:$0x1]
      %v1411 = vmul.f32 %v1410, %v1408
      %v1412 = vadd.f32 %v1409, %v1411
      %v1413 = vld [vmem:[#allocation2] sm:$0xff]
      %v1414 = vld [vmem:[#allocation3] sm:$0xff]
      %v1416 = vlaneseq
      %v1417 = vshrl.u32 %v1416, 7
      %v1418 = vsub.s32 0, %v1417
      %v1419 = vrot.slane %v1408, %v1418
      %v1421 = vmul.f32 %v1419, %v1414
      %v1422 = vadd.f32 %v1413, %v1421
      %v1424 = vlaneseq
      %v1425 = vshrl.u32 %v1424, 7
      %v1426 = vsub.s32 0, %v1425
      %v1427 = vrot.slane %v1412, %v1426
      %v1429 = vadd.f32 %v1422, %v1427
      %1430 = vst [vmem:[#allocation10] sm:$0xff] %v1429
    $region53: #{tpu_custom_call.1} parent=1 // pred_fallthru
      _
    // Predicated region
    $region54: #{tpu_custom_call.1} parent=1 // pred_check
      _
    $region55: #{tpu_custom_call.1} parent=1 // pred_check_branch
      %1432 = sbr.rel (0) target = $region57
    $region56: #{tpu_custom_call.1} parent=1 // pred_region
      %s1434 = ssub.s32 128, 128
      %1435 = vsyncadd [#allocation6], %s1434
      %s1437 = sshll.u32 [#allocation10], 4
      %s1438 = int_to_ptr.vmem [resolvable:$true] %s1437
      %1440 = dma.vmem_to_hbm [thread:$0]  %s1438, 128, %s7, [#allocation6]
    $region57: #{tpu_custom_call.1} parent=1 // pred_fallthru
      _
    // Predicated region
    $region58: #{tpu_custom_call.1} parent=1 // pred_check
      _
    $region59: #{tpu_custom_call.1} parent=1 // pred_check_branch
      %1442 = sbr.rel (0) target = $region61
    $region60: #{tpu_custom_call.1} parent=1 // pred_region
      %1443 = dma.done [#allocation6], 128
    $region61: #{tpu_custom_call.1} parent=1 // pred_fallthru
      _
    %1444 = vsyncpa [#allocation5], 1
    %1445 = vsyncpa [#allocation8], 1
    %1446 = vsyncpa [#allocation6], 1

</llo_original>
